<compile_context>
chip_gen: v6e
topology: v6e:2x2x1
jax: 0.10.0
libtpu: 0.0.40
codegen_flags: <defaults>
</compile_context>

<pallas_src>
import functools

import numpy as np

import jax
import jax.numpy as jnp
from jax.experimental import pallas as pl
from jax.experimental.pallas import tpu as pltpu


_LANE = 128
_ACC_BUDGET = 768 * 1024            # per-step f32 accumulator budget (bytes)
_FUSE_CIN_MAX = 64                  # fuse the 3 dx taps (K = 3*Cin) when Cin <= this
_X_SINGLE_BUFFER_BYTES = 8 << 20    # single-buffer the x block above this size


def _tpu_generation():
    """Best-effort (vmem_capacity_bytes, preferred MXU N width); conservative fallback."""
    try:
        kind = jax.devices()[0].device_kind.lower()
    except Exception:  # pragma: no cover
        kind = ""
    table = (
        (("v7", "7x"), (64, 256)),
        (("v6", "6e"), (128, 256)),
        (("v5",), (128, 128)),
        (("v4",), (128, 128)),
        (("v3", "v2"), (16, 128)),
    )
    vmem_mib, mxu_n = 64, 128       # unknown chip: assume small VMEM, 128-wide MXU
    for tags, (mib, n) in table:
        if any(t in kind for t in tags):
            vmem_mib, mxu_n = mib, n
            break
    return vmem_mib * 1024 * 1024, mxu_n


def _pick_tile_h(H, wp, tile_co, min_h_tiles):
    """Pick tile_h with (tile_h*wp) % 8 == 0, the (tile_h*wp, tile_co) f32 accumulator
    under budget, and at least `min_h_tiles` row tiles (keeps the 2nd TC fed).  Among
    valid choices, minimize padded rows, then maximize the tile.  H is padded up to a
    multiple of the returned tile_h by the caller (no silent full-H fallback)."""
    max_rows = max(8, _ACC_BUDGET // (tile_co * 4))
    best_key, best_th = None, None
    for th in range(1, H + 1):
        rows = th * wp
        if rows > max_rows:
            break
        if rows % 8:
            continue
        n_tiles = -(-H // th)
        if n_tiles < min_h_tiles:
            continue
        key = (n_tiles * th, -th)
        if best_key is None or key < best_key:
            best_key, best_th = key, th
    if best_th is None:
        for th in range(1, 9):          # th == 8 always sublane-aligns tile_rows
            if (th * wp) % 8 == 0:
                best_th = th
                break
    return best_th


def _conv3bn_kernel(x_ref, w_ref, *refs, tile_rows, wp, cin, fuse_dx, apply_scale):
    """One (batch, cout-tile, row-tile) grid step.

    x_ref : (1, hp*wp, Ck)           flattened, halo-padded image (Ck = 3*Cin if fused)
    w_ref : (3, 3*Cin, TILE_CO)      conv weights, row order (dx, ci) inside each dy
    scale_ref (only if apply_scale): (1, TILE_CO)   folded BN scale
    shift_ref: (1, TILE_CO)          folded BN shift + conv bias (f32)
    o_ref : (1, tile_rows, TILE_CO)
    """
    if apply_scale:
        scale_ref, shift_ref, o_ref = refs
    else:
        shift_ref, o_ref = refs

    row0 = pl.program_id(2) * tile_rows
    row0 = pl.multiple_of(row0, 8)       # tile_rows is a multiple of 8 by construction

    def tap(off):
        start = row0 + off
        if off % 8 == 0:
            start = pl.multiple_of(start, 8)
        # Read straight from the canonical x VMEM block — no window/patch copies.
        return x_ref[0, pl.ds(start, tile_rows), :]

    acc = None                           # initialized from the first dot (no zeros pass)
    if fuse_dx:
        # dx taps pre-interleaved along channels: one K=3*Cin matmul per dy (3 dots).
        for dy in range(3):
            d = jnp.dot(tap(dy * wp), w_ref[dy], preferred_element_type=jnp.float32)
            acc = d if acc is None else acc + d
    else:
        for dy in range(3):
            for dx in range(3):
                d = jnp.dot(tap(dy * wp + dx),
                            w_ref[dy, dx * cin:(dx + 1) * cin, :],
                            preferred_element_type=jnp.float32)
                acc = d if acc is None else acc + d

    y = acc                              # f32 epilogue
    if apply_scale:                      # compiled out when bn=False
        y = y * scale_ref[...]
    y = y + shift_ref[...]
    y = jnp.maximum(y, 0.0)              # ReLU
    o_ref[...] = y[None].astype(o_ref.dtype)


def conv3bn_forward_nhwc(x_nhwc, weight, bias, bn_params=None, eps=1e-5,
                         compute_dtype=jnp.bfloat16, out_dtype=None):
    """Conv3BN forward on NHWC input; returns NHWC output in `out_dtype`."""
    N, H, W, Cin = x_nhwc.shape
    Cout = weight.shape[0]
    out_dtype = compute_dtype if out_dtype is None else out_dtype

    vmem_cap, mxu_n = _tpu_generation()

    # Cout tiling: lane-dense 128/256-wide tiles when Cout is big enough; for small Cout
    # keep the true width (masked stores beat a 16x-padded HBM writeback).
    if Cout >= _LANE:
        tile_co = 256 if (mxu_n == 256 and Cout > _LANE) else _LANE
        cout_p = tile_co * pl.cdiv(Cout, tile_co)
    else:
        tile_co = cout_p = Cout

    wp = W + 2                           # width + conv halo
    min_h_tiles = 2 if N == 1 else 1     # keep the 2nd TensorCore fed on v7x
    tile_h = _pick_tile_h(H, wp, tile_co, min_h_tiles)
    n_h = -(-H // tile_h)
    H_pad = tile_h * n_h
    hp = H_pad + 3                       # 1 top halo + H_pad rows + 2 bottom (halo+slack)
    tile_rows = tile_h * wp

    fuse_dx = Cin <= _FUSE_CIN_MAX

    # Halo pad + flatten (H, W) -> rows (contiguous, free in HBM).
    xp = jnp.pad(x_nhwc, ((0, 0), (1, hp - 1 - H), (1, 1), (0, 0)))
    xflat = xp.reshape(N, hp * wp, Cin).astype(compute_dtype)
    if fuse_dx:
        # Pre-interleave the three dx taps along channels (wrapper-side, plain XLA):
        # xcat[n, p, dx*Cin + ci] == xflat[n, p + dx, ci].
        P = hp * wp
        xe = jnp.pad(xflat, ((0, 0), (0, 2), (0, 0)))
        xkern = jnp.concatenate([xe[:, d:d + P, :] for d in range(3)], axis=-1)
        cin_k = 3 * Cin
    else:
        xkern = xflat
        cin_k = Cin

    # OIHW -> (3, 3*Cin, cout_p); row order (dx, ci) inside each dy matches the interleave.
    w = jnp.transpose(weight, (2, 3, 1, 0))                    # (3, 3, Cin, Cout) HWIO
    w = jnp.pad(w, ((0, 0), (0, 0), (0, 0), (0, cout_p - Cout)))
    w = w.reshape(3, 3 * Cin, cout_p).astype(compute_dtype)

    # Fold conv bias (+ eval-mode BN) into a per-channel f32 scale/shift epilogue.
    if bn_params is None:
        scale = None
        shift = bias.astype(jnp.float32)
    else:
        g = bn_params["gamma"].astype(jnp.float32)
        b = bn_params["beta"].astype(jnp.float32)
        m = bn_params["running_mean"].astype(jnp.float32)
        v = bn_params["running_var"].astype(jnp.float32)
        s = g / jnp.sqrt(v + eps)
        scale = s
        shift = bias.astype(jnp.float32) * s + b - m * s
    # TODO(synk): training-mode BatchNorm (per-batch statistics + running-stat update)
    # needs a cross-batch reduction pass; only eval-mode BN is folded here.
    shift_p = jnp.pad(shift, (0, cout_p - Cout)).reshape(1, cout_p)

    apply_scale = scale is not None
    grid = (N, cout_p // tile_co, n_h)   # h innermost: weight/scale tiles stay resident

    x_block_bytes = hp * wp * cin_k * np.dtype(compute_dtype).itemsize
    x_spec_kwargs = {}
    if x_block_bytes > _X_SINGLE_BUFFER_BYTES:
        # x block index only changes with n; don't pay for a 2nd copy of a big image.
        x_spec_kwargs["pipeline_mode"] = pl.Buffered(1)
    # TODO(synk): for very large images / deep Cin (single x block beyond the VMEM
    # budget) add a wrapper-level H-slab split and/or an "arbitrary" Cin grid axis with
    # a VMEM accumulator scratch.

    in_specs = [
        pl.BlockSpec((1, hp * wp, cin_k), lambda n, c, h: (n, 0, 0), **x_spec_kwargs),
        pl.BlockSpec((3, 3 * Cin, tile_co), lambda n, c, h: (0, 0, c)),
    ]
    args = [xkern, w]
    if apply_scale:
        scale_p = jnp.pad(scale, (0, cout_p - Cout)).reshape(1, cout_p)
        in_specs.append(pl.BlockSpec((1, tile_co), lambda n, c, h: (0, c)))
        args.append(scale_p)
    in_specs.append(pl.BlockSpec((1, tile_co), lambda n, c, h: (0, c)))
    args.append(shift_p)

    kernel = functools.partial(_conv3bn_kernel, tile_rows=tile_rows, wp=wp, cin=Cin,
                               fuse_dx=fuse_dx, apply_scale=apply_scale)

    # ~75% of the generation's physical VMEM (leave headroom for compiler scratch).
    vmem_limit = min(int(vmem_cap * 0.75), 112 * 1024 * 1024)

    out_flat = pl.pallas_call(
        kernel,
        out_shape=jax.ShapeDtypeStruct((N, H_pad * wp, cout_p), out_dtype),
        grid=grid,
        in_specs=in_specs,
        out_specs=pl.BlockSpec((1, tile_rows, tile_co), lambda n, c, h: (n, h, c)),
        compiler_params=pltpu.CompilerParams(
            dimension_semantics=("parallel", "parallel", "parallel"),
            vmem_limit_bytes=vmem_limit),
    )(*args)

    # Un-flatten rows, drop junk halo columns / padded rows / padded channels.
    out = out_flat.reshape(N, H_pad, wp, cout_p)[:, :H, :W, :Cout]
    return out


def conv3bn_forward(x_nchw, weight, bias, bn_params=None, eps=1e-5,
                    compute_dtype=jnp.bfloat16, out_dtype=None):
    """PyTorch-layout wrapper: NCHW in, NCHW out (cast back to the input dtype).

    TODO(synk): in a full NHWC-native model these boundary transposes disappear; they
    are kept only to match the PyTorch (NCHW) module interface.
    """
    x_nhwc = jnp.transpose(x_nchw, (0, 2, 3, 1))
    out = conv3bn_forward_nhwc(x_nhwc, weight, bias, bn_params, eps,
                               compute_dtype, out_dtype)
    return jnp.transpose(out, (0, 3, 1, 2)).astype(x_nchw.dtype)


def _reference(x_nchw, weight, bias, bn_params=None, eps=1e-5):
    """Pure-JAX reference (lax conv) for correctness check."""
    y = jax.lax.conv_general_dilated(
        x_nchw, weight, window_strides=(1, 1), padding=((1, 1), (1, 1)),
        dimension_numbers=("NCHW", "OIHW", "NCHW"))
    y = y + bias.reshape(1, -1, 1, 1)
    if bn_params is not None:
        g = bn_params["gamma"].reshape(1, -1, 1, 1)
        b = bn_params["beta"].reshape(1, -1, 1, 1)
        m = bn_params["running_mean"].reshape(1, -1, 1, 1)
        v = bn_params["running_var"].reshape(1, -1, 1, 1)
        y = (y - m) * g / jnp.sqrt(v + eps) + b
    return jnp.maximum(y, 0.0)


if __name__ == "__main__":
    key = jax.random.PRNGKey(0)
    k_x, k_w, k_b, k_g, k_beta, k_m, k_v = jax.random.split(key, 7)

    N, Cin, Cout, H, W = 2, 4, 8, 16, 16

    x = jax.random.normal(k_x, (N, Cin, H, W), jnp.float32)
    fan_in = Cin * 3 * 3
    bound = 1.0 / (fan_in ** 0.5)
    weight = jax.random.uniform(k_w, (Cout, Cin, 3, 3), jnp.float32, -bound, bound)
    bias = jax.random.uniform(k_b, (Cout,), jnp.float32, -bound, bound)

    # --- bn=False path (module default) ---
    ref = _reference(x, weight, bias, bn_params=None)

    out_f32 = jax.block_until_ready(
        conv3bn_forward(x, weight, bias, bn_params=None, compute_dtype=jnp.float32))
    assert out_f32.shape == (N, Cout, H, W)
    assert jnp.allclose(out_f32, ref, rtol=1e-3, atol=1e-3)

    out_bf16 = jax.block_until_ready(conv3bn_forward(x, weight, bias, bn_params=None))
    assert jnp.allclose(out_bf16, ref, rtol=5e-2, atol=5e-2)

    # --- bn=True path (eval-mode BatchNorm2d folded into scale/shift) ---
    bn_params = {
        "gamma": jax.random.uniform(k_g, (Cout,), jnp.float32, 0.5, 1.5),
        "beta": jax.random.normal(k_beta, (Cout,), jnp.float32) * 0.1,
        "running_mean": jax.random.normal(k_m, (Cout,), jnp.float32) * 0.1,
        "running_var": jax.random.uniform(k_v, (Cout,), jnp.float32, 0.5, 1.5),
    }
    ref_bn = _reference(x, weight, bias, bn_params=bn_params)

    out_bn_f32 = jax.block_until_ready(
        conv3bn_forward(x, weight, bias, bn_params=bn_params,
                        compute_dtype=jnp.float32))
    assert jnp.allclose(out_bn_f32, ref_bn, rtol=1e-3, atol=1e-3)

    out_bn_bf16 = jax.block_until_ready(
        conv3bn_forward(x, weight, bias, bn_params=bn_params))
    assert jnp.allclose(out_bn_bf16, ref_bn, rtol=5e-2, atol=5e-2)

    print("KERNEL_OK")
</pallas_src>

<mosaic_0001>
module attributes {stable_mosaic.version = 11 : i64} {
  func.func @_conv3bn_kernel(%arg0: i32, %arg1: i32, %arg2: i32, %arg3: memref<1x342x12xf32, #tpu.memory_space<vmem>>, %arg4: memref<3x12x8xf32, #tpu.memory_space<vmem>>, %arg5: memref<1x8xf32, #tpu.memory_space<vmem>>, %arg6: memref<1x288x8xf32, #tpu.memory_space<vmem>>) attributes {dimension_semantics = [#tpu.dimension_semantics<parallel>, #tpu.dimension_semantics<parallel>, #tpu.dimension_semantics<parallel>], iteration_bounds = array<i64: 2, 1, 1>, scalar_prefetch = 0 : i64, scratch_operands = 0 : i64, tpu.core_type = #tpu.core_type<tc>, window_params = [{transform_indices = @transform_0, window_bounds = array<i64: 1, 342, 12>}, {transform_indices = @transform_1, window_bounds = array<i64: 3, 12, 8>}, {transform_indices = @transform_2, window_bounds = array<i64: 1, 8>}, {transform_indices = @transform_3, window_bounds = array<i64: 1, 288, 8>}]} {
    %c288_i32 = arith.constant 288 : i32
    %0 = arith.muli %arg2, %c288_i32 : i32
    %1 = tpu.assume_multiple %0, 8 : i32
    %c0_i32 = arith.constant 0 : i32
    %2 = arith.addi %1, %c0_i32 : i32
    %3 = tpu.assume_multiple %2, 8 : i32
    %c0 = arith.constant 0 : index
    %4 = arith.index_cast %3 : i32 to index
    %c0_0 = arith.constant 0 : index
    %5 = vector.load %arg3[%c0, %4, %c0_0] : memref<1x342x12xf32, #tpu.memory_space<vmem>>, vector<1x288x12xf32>
    %6 = vector.shape_cast %5 : vector<1x288x12xf32> to vector<288x12xf32>
    %c0_1 = arith.constant 0 : index
    %c0_2 = arith.constant 0 : index
    %c0_3 = arith.constant 0 : index
    %7 = vector.load %arg4[%c0_1, %c0_2, %c0_3] : memref<3x12x8xf32, #tpu.memory_space<vmem>>, vector<1x12x8xf32>
    %8 = vector.shape_cast %7 : vector<1x12x8xf32> to vector<12x8xf32>
    %cst = arith.constant dense<0.000000e+00> : vector<288x8xf32>
    %9 = tpu.matmul %6, %8, %cst {dimension_numbers = #tpu.dot_dimension_numbers<[1], [0], [0], [1], [0, 0, 1, 1], [], []>} : vector<288x12xf32>, vector<12x8xf32>, vector<288x8xf32> -> vector<288x8xf32>
    %c18_i32 = arith.constant 18 : i32
    %10 = arith.addi %1, %c18_i32 : i32
    %c0_4 = arith.constant 0 : index
    %11 = arith.index_cast %10 : i32 to index
    %c0_5 = arith.constant 0 : index
    %12 = vector.load %arg3[%c0_4, %11, %c0_5] : memref<1x342x12xf32, #tpu.memory_space<vmem>>, vector<1x288x12xf32>
    %13 = vector.shape_cast %12 : vector<1x288x12xf32> to vector<288x12xf32>
    %c1 = arith.constant 1 : index
    %c0_6 = arith.constant 0 : index
    %c0_7 = arith.constant 0 : index
    %14 = vector.load %arg4[%c1, %c0_6, %c0_7] : memref<3x12x8xf32, #tpu.memory_space<vmem>>, vector<1x12x8xf32>
    %15 = vector.shape_cast %14 : vector<1x12x8xf32> to vector<12x8xf32>
    %cst_8 = arith.constant dense<0.000000e+00> : vector<288x8xf32>
    %16 = tpu.matmul %13, %15, %cst_8 {dimension_numbers = #tpu.dot_dimension_numbers<[1], [0], [0], [1], [0, 0, 1, 1], [], []>} : vector<288x12xf32>, vector<12x8xf32>, vector<288x8xf32> -> vector<288x8xf32>
    %17 = arith.addf %9, %16 : vector<288x8xf32>
    %c36_i32 = arith.constant 36 : i32
    %18 = arith.addi %1, %c36_i32 : i32
    %c0_9 = arith.constant 0 : index
    %19 = arith.index_cast %18 : i32 to index
    %c0_10 = arith.constant 0 : index
    %20 = vector.load %arg3[%c0_9, %19, %c0_10] : memref<1x342x12xf32, #tpu.memory_space<vmem>>, vector<1x288x12xf32>
    %21 = vector.shape_cast %20 : vector<1x288x12xf32> to vector<288x12xf32>
    %c2 = arith.constant 2 : index
    %c0_11 = arith.constant 0 : index
    %c0_12 = arith.constant 0 : index
    %22 = vector.load %arg4[%c2, %c0_11, %c0_12] : memref<3x12x8xf32, #tpu.memory_space<vmem>>, vector<1x12x8xf32>
    %23 = vector.shape_cast %22 : vector<1x12x8xf32> to vector<12x8xf32>
    %cst_13 = arith.constant dense<0.000000e+00> : vector<288x8xf32>
    %24 = tpu.matmul %21, %23, %cst_13 {dimension_numbers = #tpu.dot_dimension_numbers<[1], [0], [0], [1], [0, 0, 1, 1], [], []>} : vector<288x12xf32>, vector<12x8xf32>, vector<288x8xf32> -> vector<288x8xf32>
    %25 = arith.addf %17, %24 : vector<288x8xf32>
    %c0_14 = arith.constant 0 : index
    %c0_15 = arith.constant 0 : index
    %26 = vector.load %arg5[%c0_14, %c0_15] : memref<1x8xf32, #tpu.memory_space<vmem>>, vector<1x8xf32>
    %27 = vector.broadcast %26 : vector<1x8xf32> to vector<288x8xf32>
    %28 = arith.addf %25, %27 : vector<288x8xf32>
    %cst_16 = arith.constant 0.000000e+00 : f32
    %29 = vector.broadcast %cst_16 : f32 to vector<288x8xf32>
    %30 = arith.maximumf %28, %29 : vector<288x8xf32>
    %31 = vector.shape_cast %30 : vector<288x8xf32> to vector<1x288x8xf32>
    %c0_17 = arith.constant 0 : index
    %c0_18 = arith.constant 0 : index
    %c0_19 = arith.constant 0 : index
    %32 = vector.load %arg6[%c0_17, %c0_18, %c0_19] : memref<1x288x8xf32, #tpu.memory_space<vmem>>, vector<1x288x8xf32>
    tpu.vector_store %arg6[%c0_17, %c0_18, %c0_19], %31 {strides = array<i32>} : memref<1x288x8xf32, #tpu.memory_space<vmem>>, vector<1x288x8xf32>,
    return
  }
  func.func @transform_0(%arg0: i32, %arg1: i32, %arg2: i32) -> (i32, i32, i32) {
    %c0_i32 = arith.constant 0 : i32
    %c0_i32_0 = arith.constant 0 : i32
    %c0_i32_1 = arith.constant 0 : i32
    return %arg0, %c0_i32, %c0_i32_0 : i32, i32, i32
  }
  func.func @transform_1(%arg0: i32, %arg1: i32, %arg2: i32) -> (i32, i32, i32) {
    %c0_i32 = arith.constant 0 : i32
    %c0_i32_0 = arith.constant 0 : i32
    %c0_i32_1 = arith.constant 0 : i32
    return %c0_i32, %c0_i32_0, %arg1 : i32, i32, i32
  }
  func.func @transform_2(%arg0: i32, %arg1: i32, %arg2: i32) -> (i32, i32) {
    %c0_i32 = arith.constant 0 : i32
    %c0_i32_0 = arith.constant 0 : i32
    return %c0_i32, %arg1 : i32, i32
  }
  func.func @transform_3(%arg0: i32, %arg1: i32, %arg2: i32) -> (i32, i32, i32) {
    %c0_i32 = arith.constant 0 : i32
    return %arg0, %arg2, %arg1 : i32, i32, i32
  }
}

</mosaic_0001>

<llo_original>
// kernel: tpu_custom_call.1
$region0: #{tpu_custom_call.1}
  #allocation0 [shape = 'u32[]', space=smem, size = 0x4, offset = 0x4, fixed_abs, tag = 'smem constant byte address 0x4 - core index']
  #allocation1 [shape = 'u32[144,128]{1,0:T(1,128)}', space=vmem, size = 0x12000, scoped, tag = 'internal scratch']
  %s0 = inlined_call_operand.vmem [shape: f32[2,342,12], index: 0, kind: input, shape index: {}]
  %s1 = inlined_call_operand.vmem [shape: f32[3,12,8], index: 1, kind: input, shape index: {}]
  %s2 = inlined_call_operand.vmem [shape: f32[1,8], index: 2, kind: input, shape index: {}]
  %s3 = inlined_call_operand.vmem [shape: f32[2,288,8], index: 3, kind: output, shape index: {}]
  %s4 = sld [smem:[#allocation0]]
  $region45: #{tpu_custom_call.1} parent=0
    _
  %s6 = ssub.s32 1, %s4
  %s7 = scalar_select 0, %s6, %s4
  loop: start=0, step=1, limit=4
  $region2: #{tpu_custom_call.1} parent=0 // loop_pre_header
    _
  $region3: #{tpu_custom_call.1} parent=0 // loop_header
    %s9 = sphi 0, %s13
    %p10 = scmp.ge.s32.totalorder %s9, 4
    %s16 = sphi 0, %s35
    %s17 = sphi 0, %s31
    %s18 = sphi 0, %s27
    %s19 = sphi 0, %s16
    %s20 = sphi 0, %s17
    %s21 = sphi 0, %s18
    %s22 = sphi 0, %s19
    %s23 = sphi 0, %s20
    %s24 = sphi 0, %s21
    %s38 = sphi 0, %s40
    %s41 = sphi 0, %s38
    %s42 = sphi 0, %s41
    %s58 = sphi 0, %s42
    %s64 = sphi 0, %s66
    %s67 = sphi 0, %s64
    %s68 = sphi 0, %s67
    %s84 = sphi 0, %s68
    %s90 = sphi 0, %s92
    %s93 = sphi 0, %s90
    %s94 = sphi 0, %s93
    %s110 = sphi 0, %s94
    %s120 = sphi 0, %s122
    %s123 = sphi 0, %s120
    %s124 = sphi 0, %s123
    %s140 = sphi 0, %s124
  $region4: #{tpu_custom_call.1} parent=0 // loop_header_branch
    %12 = sbr.rel (%p10) target = $region8
  $region5: #{tpu_custom_call.1} parent=0 // loop_body
    %s14 = ssub.s32 %s9, 1
    %s15 = ssub.s32 %s9, 2
    %s25 = sadd.s32 1, %s18
    %p26 = scmp.ge.s32.totalorder %s25, 1
    %s27 = scalar_select %p26, 0, %s25
    %s28 = sadd.s32 1, %s17
    %s29 = scalar_select %p26, %s28, %s17
    %p30 = scmp.ge.s32.totalorder %s29, 1
    %s31 = scalar_select %p30, 0, %s29
    %s32 = sadd.s32 1, %s16
    %s33 = scalar_select %p30, %s32, %s16
    %p34 = scmp.ge.s32.totalorder %s33, 2
    %s35 = scalar_select %p34, 0, %s33
    %s36 = ssub.s32 %s16, %s35
    %p37 = scmp.eq.s32.totalorder %s36, 0
    %s39 = sadd.s32 %s38, 1
    %s40 = scalar_select %p37, %s38, %s39
    %p43 = pneg %p37
    %p44 = scmp.eq.s32.totalorder %s9, 1
    %p45 = por %p43, %p44
    %p46 = scmp.ne.s32.totalorder %s38, %s41
    %p47 = scmp.eq.s32.totalorder %s9, 0
    %p48 = por %p46, %p47
    %p49 = scmp.ne.s32.totalorder %s38, %s41
    %p50 = scmp.eq.s32.totalorder %s14, 1
    %p51 = por %p49, %p50
    %p52 = scmp.ne.s32.totalorder %s41, %s42
    %p53 = scmp.eq.s32.totalorder %s14, 0
    %p54 = por %p52, %p53
    %p55 = scmp.ne.s32.totalorder %s41, %s42
    %p56 = scmp.eq.s32.totalorder %s15, 1
    %p57 = por %p55, %p56
    %p59 = scmp.ne.s32.totalorder %s42, %s58
    %p60 = scmp.eq.s32.totalorder %s15, 0
    %p61 = por %p59, %p60
    %s62 = ssub.s32 %s17, %s31
    %p63 = scmp.eq.s32.totalorder %s62, 0
    %s65 = sadd.s32 %s64, 1
    %s66 = scalar_select %p63, %s64, %s65
    %p69 = pneg %p63
    %p70 = scmp.eq.s32.totalorder %s9, 1
    %p71 = por %p69, %p70
    %p72 = scmp.ne.s32.totalorder %s64, %s67
    %p73 = scmp.eq.s32.totalorder %s9, 0
    %p74 = por %p72, %p73
    %p75 = scmp.ne.s32.totalorder %s64, %s67
    %p76 = scmp.eq.s32.totalorder %s14, 1
    %p77 = por %p75, %p76
    %p78 = scmp.ne.s32.totalorder %s67, %s68
    %p79 = scmp.eq.s32.totalorder %s14, 0
    %p80 = por %p78, %p79
    %p81 = scmp.ne.s32.totalorder %s67, %s68
    %p82 = scmp.eq.s32.totalorder %s15, 1
    %p83 = por %p81, %p82
    %p85 = scmp.ne.s32.totalorder %s68, %s84
    %p86 = scmp.eq.s32.totalorder %s15, 0
    %p87 = por %p85, %p86
    %s88 = ssub.s32 %s17, %s31
    %p89 = scmp.eq.s32.totalorder %s88, 0
    %s91 = sadd.s32 %s90, 1
    %s92 = scalar_select %p89, %s90, %s91
    %p95 = pneg %p89
    %p96 = scmp.eq.s32.totalorder %s9, 1
    %p97 = por %p95, %p96
    %p98 = scmp.ne.s32.totalorder %s90, %s93
    %p99 = scmp.eq.s32.totalorder %s9, 0
    %p100 = por %p98, %p99
    %p101 = scmp.ne.s32.totalorder %s90, %s93
    %p102 = scmp.eq.s32.totalorder %s14, 1
    %p103 = por %p101, %p102
    %p104 = scmp.ne.s32.totalorder %s93, %s94
    %p105 = scmp.eq.s32.totalorder %s14, 0
    %p106 = por %p104, %p105
    %p107 = scmp.ne.s32.totalorder %s93, %s94
    %p108 = scmp.eq.s32.totalorder %s15, 1
    %p109 = por %p107, %p108
    %p111 = scmp.ne.s32.totalorder %s94, %s110
    %p112 = scmp.eq.s32.totalorder %s15, 0
    %p113 = por %p111, %p112
    %s114 = ssub.s32 %s16, %s35
    %s115 = ssub.s32 %s18, %s27
    %s116 = sor.u32 %s114, %s115
    %s117 = ssub.s32 %s17, %s31
    %s118 = sor.u32 %s116, %s117
    %p119 = scmp.eq.s32.totalorder %s118, 0
    %s121 = sadd.s32 %s120, 1
    %s122 = scalar_select %p119, %s120, %s121
    %p125 = pneg %p119
    %p126 = scmp.eq.s32.totalorder %s9, 1
    %p127 = por %p125, %p126
    %p128 = scmp.ne.s32.totalorder %s120, %s123
    %p129 = scmp.eq.s32.totalorder %s9, 0
    %p130 = por %p128, %p129
    %p131 = scmp.ne.s32.totalorder %s120, %s123
    %p132 = scmp.eq.s32.totalorder %s14, 1
    %p133 = por %p131, %p132
    %p134 = scmp.ne.s32.totalorder %s123, %s124
    %p135 = scmp.eq.s32.totalorder %s14, 0
    %p136 = por %p134, %p135
    %p137 = scmp.ne.s32.totalorder %s123, %s124
    %p138 = scmp.eq.s32.totalorder %s15, 1
    %p139 = por %p137, %p138
    %p141 = scmp.ne.s32.totalorder %s124, %s140
    %p142 = scmp.eq.s32.totalorder %s15, 0
    %p143 = por %p141, %p142
    %p144 = scmp.le.s32.totalorder 1, %s9
    %p145 = scmp.lt.s32.totalorder %s9, 3
    %p146 = pnand %p144, %p145
    %p147 = pneg %p146
    // Predicated region
    $region9: #{tpu_custom_call.1} parent=5 // pred_check
      _
    $region10: #{tpu_custom_call.1} parent=5 // pred_check_branch
      %149 = sbr.rel (%p146) target = $region12
    $region11: #{tpu_custom_call.1} parent=5 // pred_region
      %s150 = ssub.s32 %s9, 1
      // Predicated region
      $region13: #{tpu_custom_call.1} parent=11 // pred_check
        %p151 = pneg %p80
      $region14: #{tpu_custom_call.1} parent=11 // pred_check_branch
        %153 = sbr.rel (%p151) target = $region16
      $region15: #{tpu_custom_call.1} parent=11 // pred_region
        %p154 = scmp.lt.s32.totalorder %s20, 0
        %s155 = scalar_select %p154, %s20, 0
        %s156 = smul.addr %s155, 8
        %s157 = scalar_lea.vmem %s1, %s156
      $region16: #{tpu_custom_call.1} parent=11 // pred_fallthru
        _
      // Predicated region
      $region17: #{tpu_custom_call.1} parent=11 // pred_check
        %p158 = pneg %p106
      $region18: #{tpu_custom_call.1} parent=11 // pred_check_branch
        %160 = sbr.rel (%p158) target = $region20
      $region19: #{tpu_custom_call.1} parent=11 // pred_region
        %p161 = scmp.lt.s32.totalorder %s20, 0
        %s162 = scalar_select %p161, %s20, 0
        %s163 = scalar_lea.vmem %s2, %s162
      $region20: #{tpu_custom_call.1} parent=11 // pred_fallthru
        _
    $region12: #{tpu_custom_call.1} parent=5 // pred_fallthru
      _
    %p164 = scmp.lt.s32.totalorder %s9, 2
    // Predicated region
    $region21: #{tpu_custom_call.1} parent=5 // pred_check
      %p165 = pneg %p164
    $region22: #{tpu_custom_call.1} parent=5 // pred_check_branch
      %167 = sbr.rel (%p165) target = $region24
    $region23: #{tpu_custom_call.1} parent=5 // pred_region
      // Predicated region
      $region25: #{tpu_custom_call.1} parent=23 // pred_check
        %p168 = pneg %p48
      $region26: #{tpu_custom_call.1} parent=23 // pred_check_branch
        %170 = sbr.rel (%p168) target = $region28
      $region27: #{tpu_custom_call.1} parent=23 // pred_region
        %p171 = scmp.lt.s32.totalorder %s16, 1
        %s172 = scalar_select %p171, %s16, 1
        %s173 = smul.addr %s172, 43
        %s174 = smul.addr %s173, 8
        %s175 = scalar_lea.vmem %s0, %s174
      $region28: #{tpu_custom_call.1} parent=23 // pred_fallthru
        _
    $region24: #{tpu_custom_call.1} parent=5 // pred_fallthru
      _
    %p176 = scmp.le.s32.totalorder 1, %s9
    %p177 = scmp.lt.s32.totalorder %s9, 3
    %p178 = pnand %p176, %p177
    %p179 = pneg %p178
    // Predicated region
    $region29: #{tpu_custom_call.1} parent=5 // pred_check
      _
    $region30: #{tpu_custom_call.1} parent=5 // pred_check_branch
      %181 = sbr.rel (%p178) target = $region32
    $region31: #{tpu_custom_call.1} parent=5 // pred_region
      %s182 = ssub.s32 %s9, 1
      %p183 = scmp.lt.s32.totalorder %s19, 1
      %s184 = scalar_select %p183, %s19, 1
      %s185 = smul.addr %s184, 43
      %s186 = smul.addr %s185, 8
      %s187 = scalar_lea.vmem %s0, %s186
      %p188 = pneg %p54
      %p189 = pneg %p51
      %p190 = scmp.lt.s32.totalorder %s20, 0
      %s191 = scalar_select %p190, %s20, 0
      %s192 = smul.addr %s191, 8
      %s193 = scalar_lea.vmem %s1, %s192
      %p194 = pneg %p80
      %p195 = pneg %p77
      %p196 = scmp.lt.s32.totalorder %s20, 0
      %s197 = scalar_select %p196, %s20, 0
      %s198 = scalar_lea.vmem %s2, %s197
      %p199 = pneg %p106
      %p200 = pneg %p103
      %p201 = pneg %p136
      %p202 = pneg %p133
      %s203 = smul.u32 36, %s21
      %p204 = scmp.lt.s32.totalorder %s19, 1
      %s205 = scalar_select %p204, %s19, 1
      %p206 = scmp.lt.s32.totalorder %s203, 35
      %s207 = scalar_select %p206, %s203, 35
      %p208 = scmp.lt.s32.totalorder %s20, 0
      %s209 = scalar_select %p208, %s20, 0
      %s210 = sadd.s32 %s209, %s207
      %s211 = smul.addr %s205, 36
      %s212 = sadd.s32 %s210, %s211
      %s213 = smul.addr %s212, 8
      %s214 = scalar_lea.vmem %s3, %s213
      %p215 = scmp.lt.s32.totalorder %s19, 1
      %s216 = scalar_select %p215, %s19, 1
      %s217 = smul.addr %s216, 43
      %s218 = smul.addr %s217, 8
      %s219 = scalar_lea.vmem %s0, %s218
      %p220 = scmp.lt.s32.totalorder %s20, 0
      %s221 = scalar_select %p220, %s20, 0
      %s222 = smul.addr %s221, 8
      %s223 = scalar_lea.vmem %s1, %s222
      %p224 = scmp.lt.s32.totalorder %s20, 0
      %s225 = scalar_select %p224, %s20, 0
      %s226 = scalar_lea.vmem %s2, %s225
      %s227 = smul.u32 36, %s21
      %p228 = scmp.lt.s32.totalorder %s19, 1
      %s229 = scalar_select %p228, %s19, 1
      %p230 = scmp.lt.s32.totalorder %s227, 35
      %s231 = scalar_select %p230, %s227, 35
      %p232 = scmp.lt.s32.totalorder %s20, 0
      %s233 = scalar_select %p232, %s20, 0
      %s234 = sadd.s32 %s233, %s231
      %s235 = smul.addr %s229, 36
      %s236 = sadd.s32 %s234, %s235
      %s237 = smul.addr %s236, 8
      %s238 = scalar_lea.vmem %s3, %s237
      %s239 = smul.u32 36, %s21
      %s240 = smul.u32 %s21, 288
      %s241 = scalar_lea.vmem %s219, %s240
      %v242 = vld [vmem:[%s241] sm:$0xff]
      %v243 = vld [vmem:[%s241 + $0x8] sm:$0xff]
      %v244 = vld [vmem:[%s241 + $0x10] sm:$0xff]
      %v245 = vld [vmem:[%s241 + $0x18] sm:$0xff]
      %v246 = vld [vmem:[%s241 + $0x20] sm:$0xff]
      %v247 = vld [vmem:[%s241 + $0x28] sm:$0xff]
      %v248 = vld [vmem:[%s241 + $0x30] sm:$0xff]
      %v249 = vld [vmem:[%s241 + $0x38] sm:$0xff]
      %v250 = vld [vmem:[%s241 + $0x40] sm:$0xff]
      %v251 = vld [vmem:[%s241 + $0x48] sm:$0xff]
      %v252 = vld [vmem:[%s241 + $0x50] sm:$0xff]
      %v253 = vld [vmem:[%s241 + $0x58] sm:$0xff]
      %v254 = vld [vmem:[%s241 + $0x60] sm:$0xff]
      %v255 = vld [vmem:[%s241 + $0x68] sm:$0xff]
      %v256 = vld [vmem:[%s241 + $0x70] sm:$0xff]
      %v257 = vld [vmem:[%s241 + $0x78] sm:$0xff]
      %v258 = vld [vmem:[%s241 + $0x80] sm:$0xff]
      %v259 = vld [vmem:[%s241 + $0x88] sm:$0xff]
      %v260 = vld [vmem:[%s241 + $0x90] sm:$0xff]
      %v261 = vld [vmem:[%s241 + $0x98] sm:$0xff]
      %v262 = vld [vmem:[%s241 + $0xa0] sm:$0xff]
      %v263 = vld [vmem:[%s241 + $0xa8] sm:$0xff]
      %v264 = vld [vmem:[%s241 + $0xb0] sm:$0xff]
      %v265 = vld [vmem:[%s241 + $0xb8] sm:$0xff]
      %v266 = vld [vmem:[%s241 + $0xc0] sm:$0xff]
      %v267 = vld [vmem:[%s241 + $0xc8] sm:$0xff]
      %v268 = vld [vmem:[%s241 + $0xd0] sm:$0xff]
      %v269 = vld [vmem:[%s241 + $0xd8] sm:$0xff]
      %v270 = vld [vmem:[%s241 + $0xe0] sm:$0xff]
      %v271 = vld [vmem:[%s241 + $0xe8] sm:$0xff]
      %v272 = vld [vmem:[%s241 + $0xf0] sm:$0xff]
      %v273 = vld [vmem:[%s241 + $0xf8] sm:$0xff]
      %v274 = vld [vmem:[%s241 + $0x100] sm:$0xff]
      %v275 = vld [vmem:[%s241 + $0x108] sm:$0xff]
      %v276 = vld [vmem:[%s241 + $0x110] sm:$0xff]
      %v277 = vld [vmem:[%s241 + $0x118] sm:$0xff]
      %v278 = vld [vmem:[%s223] sm:$0xff]
      %v279 = vld [vmem:[%s223 + $0x8] sm:$0xf]
      %s280 = sadd.s32 %s240, 18
      %s281 = scalar_lea.vmem %s219, %s280
      %v282 = vld [vmem:[%s281] sm:$0xff]
      %v283 = vld [vmem:[%s281 + $0x8] sm:$0xff]
      %v284 = vld [vmem:[%s281 + $0x10] sm:$0xff]
      %v285 = vld [vmem:[%s281 + $0x18] sm:$0xff]
      %v286 = vld [vmem:[%s281 + $0x20] sm:$0xff]
      %v287 = vld [vmem:[%s281 + $0x28] sm:$0xff]
      %v288 = vld [vmem:[%s281 + $0x30] sm:$0xff]
      %v289 = vld [vmem:[%s281 + $0x38] sm:$0xff]
      %v290 = vld [vmem:[%s281 + $0x40] sm:$0xff]
      %v291 = vld [vmem:[%s281 + $0x48] sm:$0xff]
      %v292 = vld [vmem:[%s281 + $0x50] sm:$0xff]
      %v293 = vld [vmem:[%s281 + $0x58] sm:$0xff]
      %v294 = vld [vmem:[%s281 + $0x60] sm:$0xff]
      %v295 = vld [vmem:[%s281 + $0x68] sm:$0xff]
      %v296 = vld [vmem:[%s281 + $0x70] sm:$0xff]
      %v297 = vld [vmem:[%s281 + $0x78] sm:$0xff]
      %v298 = vld [vmem:[%s281 + $0x80] sm:$0xff]
      %v299 = vld [vmem:[%s281 + $0x88] sm:$0xff]
      %v300 = vld [vmem:[%s281 + $0x90] sm:$0xff]
      %v301 = vld [vmem:[%s281 + $0x98] sm:$0xff]
      %v302 = vld [vmem:[%s281 + $0xa0] sm:$0xff]
      %v303 = vld [vmem:[%s281 + $0xa8] sm:$0xff]
      %v304 = vld [vmem:[%s281 + $0xb0] sm:$0xff]
      %v305 = vld [vmem:[%s281 + $0xb8] sm:$0xff]
      %v306 = vld [vmem:[%s281 + $0xc0] sm:$0xff]
      %v307 = vld [vmem:[%s281 + $0xc8] sm:$0xff]
      %v308 = vld [vmem:[%s281 + $0xd0] sm:$0xff]
      %v309 = vld [vmem:[%s281 + $0xd8] sm:$0xff]
      %v310 = vld [vmem:[%s281 + $0xe0] sm:$0xff]
      %v311 = vld [vmem:[%s281 + $0xe8] sm:$0xff]
      %v312 = vld [vmem:[%s281 + $0xf0] sm:$0xff]
      %v313 = vld [vmem:[%s281 + $0xf8] sm:$0xff]
      %v314 = vld [vmem:[%s281 + $0x100] sm:$0xff]
      %v315 = vld [vmem:[%s281 + $0x108] sm:$0xff]
      %v316 = vld [vmem:[%s281 + $0x110] sm:$0xff]
      %v317 = vld [vmem:[%s281 + $0x118] sm:$0xff]
      %s318 = scalar_lea.vmem %s223, 16
      %v319 = vld [vmem:[%s318] sm:$0xff]
      %v320 = vld [vmem:[%s318 + $0x8] sm:$0xf]
      %vm321 = vcmask 97280
      %v323 = vsel %vm321, %v282, 0
      %v326 = vsel %vm321, %v283, 0
      %v329 = vsel %vm321, %v284, 0
      %v332 = vsel %vm321, %v285, 0
      %v335 = vsel %vm321, %v286, 0
      %v338 = vsel %vm321, %v287, 0
      %v341 = vsel %vm321, %v288, 0
      %v344 = vsel %vm321, %v289, 0
      %v347 = vsel %vm321, %v290, 0
      %v350 = vsel %vm321, %v291, 0
      %v353 = vsel %vm321, %v292, 0
      %v356 = vsel %vm321, %v293, 0
      %v359 = vsel %vm321, %v294, 0
      %v362 = vsel %vm321, %v295, 0
      %v365 = vsel %vm321, %v296, 0
      %v368 = vsel %vm321, %v297, 0
      %v371 = vsel %vm321, %v298, 0
      %v374 = vsel %vm321, %v299, 0
      %v377 = vsel %vm321, %v300, 0
      %v380 = vsel %vm321, %v301, 0
      %v383 = vsel %vm321, %v302, 0
      %v386 = vsel %vm321, %v303, 0
      %v389 = vsel %vm321, %v304, 0
      %v392 = vsel %vm321, %v305, 0
      %v395 = vsel %vm321, %v306, 0
      %v398 = vsel %vm321, %v307, 0
      %v401 = vsel %vm321, %v308, 0
      %v404 = vsel %vm321, %v309, 0
      %v407 = vsel %vm321, %v310, 0
      %v410 = vsel %vm321, %v311, 0
      %v413 = vsel %vm321, %v312, 0
      %v416 = vsel %vm321, %v313, 0
      %v419 = vsel %vm321, %v314, 0
      %v422 = vsel %vm321, %v315, 0
      %v425 = vsel %vm321, %v316, 0
      %v428 = vsel %vm321, %v317, 0
      %vm430 = vcmask 1043456
      %v432 = vsel %vm430, %v320, 0
      %434 = vmatprep.subr.mxu0 0.0
      %435 = vmatpush1.msra.mxu0 0.0
      %436 = vmatprep.subr.mxu0 0.0
      %437 = vmatpush1.msra.mxu0 0.0
      %438 = vmatprep.subr.mxu0 0.0
      %439 = vmatpush1.msra.mxu0 0.0
      %440 = vmatprep.subr.mxu0 0.0
      %441 = vmatpush1.msra.mxu0 0.0
      %442 = vmatprep.subr.mxu0 0.0
      %443 = vmatpush1.msra.mxu0 0.0
      %444 = vmatprep.subr.mxu0 0.0
      %445 = vmatpush1.msra.mxu0 0.0
      %446 = vmatprep.subr.mxu0 0.0
      %447 = vmatpush1.msra.mxu0 0.0
      %448 = vmatprep.subr.mxu0 0.0
      %449 = vmatpush1.msra.mxu0 0.0
      %450 = vmatprep.subr.mxu0 0.0
      %451 = vmatpush1.msra.mxu0 0.0
      %452 = vmatprep.subr.mxu0 0.0
      %453 = vmatpush1.msra.mxu0 0.0
      %454 = vmatprep.subr.mxu0 0.0
      %455 = vmatpush1.msra.mxu0 0.0
      %456 = vmatprep.subr.mxu0 0.0
      %457 = vmatpush1.msra.mxu0 0.0
      %458 = vmatprep.subr.mxu0 0.0
      %459 = vmatpush1.msra.mxu0 0.0
      %460 = vmatprep.subr.mxu0 0.0
      %461 = vmatpush1.msra.mxu0 0.0
      %462 = vmatprep.subr.mxu0 0.0
      %463 = vmatpush1.msra.mxu0 %v432
      %464 = vmatprep.subr.mxu0 0.0
      %465 = vmatpush1.msra.mxu0 %v319
      %466 = vmatprep.subr.mxu0 0.0
      %467 = vmatpush2.msra.mxu0 0.0
      %468 = vmatprep.subr.mxu0 0.0
      %469 = vmatpush2.msra.mxu0 0.0
      %470 = vmatprep.subr.mxu0 0.0
      %471 = vmatpush2.msra.mxu0 0.0
      %472 = vmatprep.subr.mxu0 0.0
      %473 = vmatpush2.msra.mxu0 0.0
      %474 = vmatprep.subr.mxu0 0.0
      %475 = vmatpush2.msra.mxu0 0.0
      %476 = vmatprep.subr.mxu0 0.0
      %477 = vmatpush2.msra.mxu0 0.0
      %478 = vmatprep.subr.mxu0 0.0
      %479 = vmatpush2.msra.mxu0 0.0
      %480 = vmatprep.subr.mxu0 0.0
      %481 = vmatpush2.msra.mxu0 0.0
      %482 = vmatprep.subr.mxu0 0.0
      %483 = vmatpush2.msra.mxu0 0.0
      %484 = vmatprep.subr.mxu0 0.0
      %485 = vmatpush2.msra.mxu0 0.0
      %486 = vmatprep.subr.mxu0 0.0
      %487 = vmatpush2.msra.mxu0 0.0
      %488 = vmatprep.subr.mxu0 0.0
      %489 = vmatpush2.msra.mxu0 0.0
      %490 = vmatprep.subr.mxu0 0.0
      %491 = vmatpush2.msra.mxu0 0.0
      %492 = vmatprep.subr.mxu0 0.0
      %493 = vmatpush2.msra.mxu0 0.0
      %494 = vmatprep.subr.mxu0 0.0
      %495 = vmatpush2.msra.mxu0 0.0
      %496 = vmatprep.subr.mxu0 0.0
      %497 = vmatpush2.msra.mxu0 0.0
      %498 = vmatprep.mubr.f32.mxu0 0.0
      %499 = vmatmul.mubr.f32.gmra.mxu0 %v323
      %v500 = vpop.f32.mrf.mxu0
      %v501 = vadd.f32 0.0, %v500
      %v502 = vpop.f32.mrf.mxu0
      %503 = vmatprep.mubr.f32.mxu0 0.0
      %504 = vmatmul.mubr.f32.gmra.mxu0 %v326
      %v505 = vpop.f32.mrf.mxu0
      %v506 = vadd.f32 0.0, %v505
      %v507 = vpop.f32.mrf.mxu0
      %508 = vmatprep.mubr.f32.mxu0 0.0
      %509 = vmatmul.mubr.f32.gmra.mxu0 %v329
      %v510 = vpop.f32.mrf.mxu0
      %v511 = vadd.f32 0.0, %v510
      %v512 = vpop.f32.mrf.mxu0
      %513 = vmatprep.mubr.f32.mxu0 0.0
      %514 = vmatmul.mubr.f32.gmra.mxu0 %v332
      %v515 = vpop.f32.mrf.mxu0
      %v516 = vadd.f32 0.0, %v515
      %v517 = vpop.f32.mrf.mxu0
      %518 = vmatprep.mubr.f32.mxu0 0.0
      %519 = vmatmul.mubr.f32.gmra.mxu0 %v335
      %v520 = vpop.f32.mrf.mxu0
      %v521 = vadd.f32 0.0, %v520
      %v522 = vpop.f32.mrf.mxu0
      %523 = vmatprep.mubr.f32.mxu0 0.0
      %524 = vmatmul.mubr.f32.gmra.mxu0 %v338
      %v525 = vpop.f32.mrf.mxu0
      %v526 = vadd.f32 0.0, %v525
      %v527 = vpop.f32.mrf.mxu0
      %528 = vmatprep.mubr.f32.mxu0 0.0
      %529 = vmatmul.mubr.f32.gmra.mxu0 %v341
      %v530 = vpop.f32.mrf.mxu0
      %v531 = vadd.f32 0.0, %v530
      %v532 = vpop.f32.mrf.mxu0
      %533 = vmatprep.mubr.f32.mxu0 0.0
      %534 = vmatmul.mubr.f32.gmra.mxu0 %v344
      %v535 = vpop.f32.mrf.mxu0
      %v536 = vadd.f32 0.0, %v535
      %v537 = vpop.f32.mrf.mxu0
      %538 = vmatprep.mubr.f32.mxu0 0.0
      %539 = vmatmul.mubr.f32.gmra.mxu0 %v347
      %v540 = vpop.f32.mrf.mxu0
      %v541 = vadd.f32 0.0, %v540
      %v542 = vpop.f32.mrf.mxu0
      %543 = vmatprep.mubr.f32.mxu0 0.0
      %544 = vmatmul.mubr.f32.gmra.mxu0 %v350
      %v545 = vpop.f32.mrf.mxu0
      %v546 = vadd.f32 0.0, %v545
      %v547 = vpop.f32.mrf.mxu0
      %548 = vmatprep.mubr.f32.mxu0 0.0
      %549 = vmatmul.mubr.f32.gmra.mxu0 %v353
      %v550 = vpop.f32.mrf.mxu0
      %v551 = vadd.f32 0.0, %v550
      %v552 = vpop.f32.mrf.mxu0
      %553 = vmatprep.mubr.f32.mxu0 0.0
      %554 = vmatmul.mubr.f32.gmra.mxu0 %v356
      %v555 = vpop.f32.mrf.mxu0
      %v556 = vadd.f32 0.0, %v555
      %v557 = vpop.f32.mrf.mxu0
      %558 = vmatprep.mubr.f32.mxu0 0.0
      %559 = vmatmul.mubr.f32.gmra.mxu0 %v359
      %v560 = vpop.f32.mrf.mxu0
      %v561 = vadd.f32 0.0, %v560
      %v562 = vpop.f32.mrf.mxu0
      %563 = vmatprep.mubr.f32.mxu0 0.0
      %564 = vmatmul.mubr.f32.gmra.mxu0 %v362
      %v565 = vpop.f32.mrf.mxu0
      %v566 = vadd.f32 0.0, %v565
      %v567 = vpop.f32.mrf.mxu0
      %568 = vmatprep.mubr.f32.mxu0 0.0
      %569 = vmatmul.mubr.f32.gmra.mxu0 %v365
      %v570 = vpop.f32.mrf.mxu0
      %v571 = vadd.f32 0.0, %v570
      %v572 = vpop.f32.mrf.mxu0
      %573 = vmatprep.mubr.f32.mxu0 0.0
      %574 = vmatmul.mubr.f32.gmra.mxu0 %v368
      %v575 = vpop.f32.mrf.mxu0
      %v576 = vadd.f32 0.0, %v575
      %v577 = vpop.f32.mrf.mxu0
      %578 = vmatprep.mubr.f32.mxu0 0.0
      %579 = vmatmul.mubr.f32.gmra.mxu0 %v371
      %v580 = vpop.f32.mrf.mxu0
      %v581 = vadd.f32 0.0, %v580
      %v582 = vpop.f32.mrf.mxu0
      %583 = vmatprep.mubr.f32.mxu0 0.0
      %584 = vmatmul.mubr.f32.gmra.mxu0 %v374
      %v585 = vpop.f32.mrf.mxu0
      %v586 = vadd.f32 0.0, %v585
      %v587 = vpop.f32.mrf.mxu0
      %588 = vmatprep.mubr.f32.mxu0 0.0
      %589 = vmatmul.mubr.f32.gmra.mxu0 %v377
      %v590 = vpop.f32.mrf.mxu0
      %v591 = vadd.f32 0.0, %v590
      %v592 = vpop.f32.mrf.mxu0
      %593 = vmatprep.mubr.f32.mxu0 0.0
      %594 = vmatmul.mubr.f32.gmra.mxu0 %v380
      %v595 = vpop.f32.mrf.mxu0
      %v596 = vadd.f32 0.0, %v595
      %v597 = vpop.f32.mrf.mxu0
      %598 = vmatprep.mubr.f32.mxu0 0.0
      %599 = vmatmul.mubr.f32.gmra.mxu0 %v383
      %v600 = vpop.f32.mrf.mxu0
      %v601 = vadd.f32 0.0, %v600
      %v602 = vpop.f32.mrf.mxu0
      %603 = vmatprep.mubr.f32.mxu0 0.0
      %604 = vmatmul.mubr.f32.gmra.mxu0 %v386
      %v605 = vpop.f32.mrf.mxu0
      %v606 = vadd.f32 0.0, %v605
      %v607 = vpop.f32.mrf.mxu0
      %608 = vmatprep.mubr.f32.mxu0 0.0
      %609 = vmatmul.mubr.f32.gmra.mxu0 %v389
      %v610 = vpop.f32.mrf.mxu0
      %v611 = vadd.f32 0.0, %v610
      %v612 = vpop.f32.mrf.mxu0
      %613 = vmatprep.mubr.f32.mxu0 0.0
      %614 = vmatmul.mubr.f32.gmra.mxu0 %v392
      %v615 = vpop.f32.mrf.mxu0
      %v616 = vadd.f32 0.0, %v615
      %v617 = vpop.f32.mrf.mxu0
      %618 = vmatprep.mubr.f32.mxu0 0.0
      %619 = vmatmul.mubr.f32.gmra.mxu0 %v395
      %v620 = vpop.f32.mrf.mxu0
      %v621 = vadd.f32 0.0, %v620
      %v622 = vpop.f32.mrf.mxu0
      %623 = vmatprep.mubr.f32.mxu0 0.0
      %624 = vmatmul.mubr.f32.gmra.mxu0 %v398
      %v625 = vpop.f32.mrf.mxu0
      %v626 = vadd.f32 0.0, %v625
      %v627 = vpop.f32.mrf.mxu0
      %628 = vmatprep.mubr.f32.mxu0 0.0
      %629 = vmatmul.mubr.f32.gmra.mxu0 %v401
      %v630 = vpop.f32.mrf.mxu0
      %v631 = vadd.f32 0.0, %v630
      %v632 = vpop.f32.mrf.mxu0
      %633 = vmatprep.mubr.f32.mxu0 0.0
      %634 = vmatmul.mubr.f32.gmra.mxu0 %v404
      %v635 = vpop.f32.mrf.mxu0
      %v636 = vadd.f32 0.0, %v635
      %v637 = vpop.f32.mrf.mxu0
      %638 = vmatprep.mubr.f32.mxu0 0.0
      %639 = vmatmul.mubr.f32.gmra.mxu0 %v407
      %v640 = vpop.f32.mrf.mxu0
      %v641 = vadd.f32 0.0, %v640
      %v642 = vpop.f32.mrf.mxu0
      %643 = vmatprep.mubr.f32.mxu0 0.0
      %644 = vmatmul.mubr.f32.gmra.mxu0 %v410
      %v645 = vpop.f32.mrf.mxu0
      %v646 = vadd.f32 0.0, %v645
      %v647 = vpop.f32.mrf.mxu0
      %648 = vmatprep.mubr.f32.mxu0 0.0
      %649 = vmatmul.mubr.f32.gmra.mxu0 %v413
      %v650 = vpop.f32.mrf.mxu0
      %v651 = vadd.f32 0.0, %v650
      %v652 = vpop.f32.mrf.mxu0
      %653 = vmatprep.mubr.f32.mxu0 0.0
      %654 = vmatmul.mubr.f32.gmra.mxu0 %v416
      %v655 = vpop.f32.mrf.mxu0
      %v656 = vadd.f32 0.0, %v655
      %v657 = vpop.f32.mrf.mxu0
      %658 = vmatprep.mubr.f32.mxu0 0.0
      %659 = vmatmul.mubr.f32.gmra.mxu0 %v419
      %v660 = vpop.f32.mrf.mxu0
      %v661 = vadd.f32 0.0, %v660
      %v662 = vpop.f32.mrf.mxu0
      %663 = vmatprep.mubr.f32.mxu0 0.0
      %664 = vmatmul.mubr.f32.gmra.mxu0 %v422
      %v665 = vpop.f32.mrf.mxu0
      %v666 = vadd.f32 0.0, %v665
      %v667 = vpop.f32.mrf.mxu0
      %668 = vmatprep.mubr.f32.mxu0 0.0
      %669 = vmatmul.mubr.f32.gmra.mxu0 %v425
      %v670 = vpop.f32.mrf.mxu0
      %v671 = vadd.f32 0.0, %v670
      %v672 = vpop.f32.mrf.mxu0
      %673 = vmatprep.mubr.f32.mxu0 0.0
      %674 = vmatmul.mubr.f32.gmra.mxu0 %v428
      %v675 = vpop.f32.mrf.mxu0
      %v676 = vadd.f32 0.0, %v675
      %v677 = vpop.f32.mrf.mxu0
      %678 = vdwg.mxu0
      %v680 = vsel %vm321, %v242, 0
      %v683 = vsel %vm321, %v243, 0
      %v686 = vsel %vm321, %v244, 0
      %v689 = vsel %vm321, %v245, 0
      %v692 = vsel %vm321, %v246, 0
      %v695 = vsel %vm321, %v247, 0
      %v698 = vsel %vm321, %v248, 0
      %v701 = vsel %vm321, %v249, 0
      %v704 = vsel %vm321, %v250, 0
      %v707 = vsel %vm321, %v251, 0
      %v710 = vsel %vm321, %v252, 0
      %v713 = vsel %vm321, %v253, 0
      %v716 = vsel %vm321, %v254, 0
      %v719 = vsel %vm321, %v255, 0
      %v722 = vsel %vm321, %v256, 0
      %v725 = vsel %vm321, %v257, 0
      %v728 = vsel %vm321, %v258, 0
      %v731 = vsel %vm321, %v259, 0
      %v734 = vsel %vm321, %v260, 0
      %v737 = vsel %vm321, %v261, 0
      %v740 = vsel %vm321, %v262, 0
      %v743 = vsel %vm321, %v263, 0
      %v746 = vsel %vm321, %v264, 0
      %v749 = vsel %vm321, %v265, 0
      %v752 = vsel %vm321, %v266, 0
      %v755 = vsel %vm321, %v267, 0
      %v758 = vsel %vm321, %v268, 0
      %v761 = vsel %vm321, %v269, 0
      %v764 = vsel %vm321, %v270, 0
      %v767 = vsel %vm321, %v271, 0
      %v770 = vsel %vm321, %v272, 0
      %v773 = vsel %vm321, %v273, 0
      %v776 = vsel %vm321, %v274, 0
      %v779 = vsel %vm321, %v275, 0
      %v782 = vsel %vm321, %v276, 0
      %v785 = vsel %vm321, %v277, 0
      %v788 = vsel %vm430, %v279, 0
      %790 = vmatprep.subr.mxu0 0.0
      %791 = vmatpush1.msra.mxu0 0.0
      %792 = vmatprep.subr.mxu0 0.0
      %793 = vmatpush1.msra.mxu0 0.0
      %794 = vmatprep.subr.mxu0 0.0
      %795 = vmatpush1.msra.mxu0 0.0
      %796 = vmatprep.subr.mxu0 0.0
      %797 = vmatpush1.msra.mxu0 0.0
      %798 = vmatprep.subr.mxu0 0.0
      %799 = vmatpush1.msra.mxu0 0.0
      %800 = vmatprep.subr.mxu0 0.0
      %801 = vmatpush1.msra.mxu0 0.0
      %802 = vmatprep.subr.mxu0 0.0
      %803 = vmatpush1.msra.mxu0 0.0
      %804 = vmatprep.subr.mxu0 0.0
      %805 = vmatpush1.msra.mxu0 0.0
      %806 = vmatprep.subr.mxu0 0.0
      %807 = vmatpush1.msra.mxu0 0.0
      %808 = vmatprep.subr.mxu0 0.0
      %809 = vmatpush1.msra.mxu0 0.0
      %810 = vmatprep.subr.mxu0 0.0
      %811 = vmatpush1.msra.mxu0 0.0
      %812 = vmatprep.subr.mxu0 0.0
      %813 = vmatpush1.msra.mxu0 0.0
      %814 = vmatprep.subr.mxu0 0.0
      %815 = vmatpush1.msra.mxu0 0.0
      %816 = vmatprep.subr.mxu0 0.0
      %817 = vmatpush1.msra.mxu0 0.0
      %818 = vmatprep.subr.mxu0 0.0
      %819 = vmatpush1.msra.mxu0 %v788
      %820 = vmatprep.subr.mxu0 0.0
      %821 = vmatpush1.msra.mxu0 %v278
      %822 = vmatprep.subr.mxu0 0.0
      %823 = vmatpush2.msra.mxu0 0.0
      %824 = vmatprep.subr.mxu0 0.0
      %825 = vmatpush2.msra.mxu0 0.0
      %826 = vmatprep.subr.mxu0 0.0
      %827 = vmatpush2.msra.mxu0 0.0
      %828 = vmatprep.subr.mxu0 0.0
      %829 = vmatpush2.msra.mxu0 0.0
      %830 = vmatprep.subr.mxu0 0.0
      %831 = vmatpush2.msra.mxu0 0.0
      %832 = vmatprep.subr.mxu0 0.0
      %833 = vmatpush2.msra.mxu0 0.0
      %834 = vmatprep.subr.mxu0 0.0
      %835 = vmatpush2.msra.mxu0 0.0
      %836 = vmatprep.subr.mxu0 0.0
      %837 = vmatpush2.msra.mxu0 0.0
      %838 = vmatprep.subr.mxu0 0.0
      %839 = vmatpush2.msra.mxu0 0.0
      %840 = vmatprep.subr.mxu0 0.0
      %841 = vmatpush2.msra.mxu0 0.0
      %842 = vmatprep.subr.mxu0 0.0
      %843 = vmatpush2.msra.mxu0 0.0
      %844 = vmatprep.subr.mxu0 0.0
      %845 = vmatpush2.msra.mxu0 0.0
      %846 = vmatprep.subr.mxu0 0.0
      %847 = vmatpush2.msra.mxu0 0.0
      %848 = vmatprep.subr.mxu0 0.0
      %849 = vmatpush2.msra.mxu0 0.0
      %850 = vmatprep.subr.mxu0 0.0
      %851 = vmatpush2.msra.mxu0 0.0
      %852 = vmatprep.subr.mxu0 0.0
      %853 = vmatpush2.msra.mxu0 0.0
      %854 = vmatprep.mubr.f32.mxu0 0.0
      %855 = vmatmul.mubr.f32.gmra.mxu0 %v680
      %v856 = vpop.f32.mrf.mxu0
      %v857 = vadd.f32 %v501, %v856
      %v858 = vpop.f32.mrf.mxu0
      %859 = vmatprep.mubr.f32.mxu0 0.0
      %860 = vmatmul.mubr.f32.gmra.mxu0 %v683
      %v861 = vpop.f32.mrf.mxu0
      %v862 = vadd.f32 %v506, %v861
      %v863 = vpop.f32.mrf.mxu0
      %864 = vmatprep.mubr.f32.mxu0 0.0
      %865 = vmatmul.mubr.f32.gmra.mxu0 %v686
      %v866 = vpop.f32.mrf.mxu0
      %v867 = vadd.f32 %v511, %v866
      %v868 = vpop.f32.mrf.mxu0
      %869 = vmatprep.mubr.f32.mxu0 0.0
      %870 = vmatmul.mubr.f32.gmra.mxu0 %v689
      %v871 = vpop.f32.mrf.mxu0
      %v872 = vadd.f32 %v516, %v871
      %v873 = vpop.f32.mrf.mxu0
      %874 = vmatprep.mubr.f32.mxu0 0.0
      %875 = vmatmul.mubr.f32.gmra.mxu0 %v692
      %v876 = vpop.f32.mrf.mxu0
      %v877 = vadd.f32 %v521, %v876
      %v878 = vpop.f32.mrf.mxu0
      %879 = vmatprep.mubr.f32.mxu0 0.0
      %880 = vmatmul.mubr.f32.gmra.mxu0 %v695
      %v881 = vpop.f32.mrf.mxu0
      %v882 = vadd.f32 %v526, %v881
      %v883 = vpop.f32.mrf.mxu0
      %884 = vmatprep.mubr.f32.mxu0 0.0
      %885 = vmatmul.mubr.f32.gmra.mxu0 %v698
      %v886 = vpop.f32.mrf.mxu0
      %v887 = vadd.f32 %v531, %v886
      %v888 = vpop.f32.mrf.mxu0
      %889 = vmatprep.mubr.f32.mxu0 0.0
      %890 = vmatmul.mubr.f32.gmra.mxu0 %v701
      %v891 = vpop.f32.mrf.mxu0
      %v892 = vadd.f32 %v536, %v891
      %v893 = vpop.f32.mrf.mxu0
      %894 = vmatprep.mubr.f32.mxu0 0.0
      %895 = vmatmul.mubr.f32.gmra.mxu0 %v704
      %v896 = vpop.f32.mrf.mxu0
      %v897 = vadd.f32 %v541, %v896
      %v898 = vpop.f32.mrf.mxu0
      %899 = vmatprep.mubr.f32.mxu0 0.0
      %900 = vmatmul.mubr.f32.gmra.mxu0 %v707
      %v901 = vpop.f32.mrf.mxu0
      %v902 = vadd.f32 %v546, %v901
      %v903 = vpop.f32.mrf.mxu0
      %904 = vmatprep.mubr.f32.mxu0 0.0
      %905 = vmatmul.mubr.f32.gmra.mxu0 %v710
      %v906 = vpop.f32.mrf.mxu0
      %v907 = vadd.f32 %v551, %v906
      %v908 = vpop.f32.mrf.mxu0
      %909 = vmatprep.mubr.f32.mxu0 0.0
      %910 = vmatmul.mubr.f32.gmra.mxu0 %v713
      %v911 = vpop.f32.mrf.mxu0
      %v912 = vadd.f32 %v556, %v911
      %v913 = vpop.f32.mrf.mxu0
      %914 = vmatprep.mubr.f32.mxu0 0.0
      %915 = vmatmul.mubr.f32.gmra.mxu0 %v716
      %v916 = vpop.f32.mrf.mxu0
      %v917 = vadd.f32 %v561, %v916
      %v918 = vpop.f32.mrf.mxu0
      %919 = vmatprep.mubr.f32.mxu0 0.0
      %920 = vmatmul.mubr.f32.gmra.mxu0 %v719
      %v921 = vpop.f32.mrf.mxu0
      %v922 = vadd.f32 %v566, %v921
      %v923 = vpop.f32.mrf.mxu0
      %924 = vmatprep.mubr.f32.mxu0 0.0
      %925 = vmatmul.mubr.f32.gmra.mxu0 %v722
      %v926 = vpop.f32.mrf.mxu0
      %v927 = vadd.f32 %v571, %v926
      %v928 = vpop.f32.mrf.mxu0
      %929 = vmatprep.mubr.f32.mxu0 0.0
      %930 = vmatmul.mubr.f32.gmra.mxu0 %v725
      %v931 = vpop.f32.mrf.mxu0
      %v932 = vadd.f32 %v576, %v931
      %v933 = vpop.f32.mrf.mxu0
      %934 = vmatprep.mubr.f32.mxu0 0.0
      %935 = vmatmul.mubr.f32.gmra.mxu0 %v728
      %v936 = vpop.f32.mrf.mxu0
      %v937 = vadd.f32 %v581, %v936
      %v938 = vpop.f32.mrf.mxu0
      %939 = vmatprep.mubr.f32.mxu0 0.0
      %940 = vmatmul.mubr.f32.gmra.mxu0 %v731
      %v941 = vpop.f32.mrf.mxu0
      %v942 = vadd.f32 %v586, %v941
      %v943 = vpop.f32.mrf.mxu0
      %944 = vmatprep.mubr.f32.mxu0 0.0
      %945 = vmatmul.mubr.f32.gmra.mxu0 %v734
      %v946 = vpop.f32.mrf.mxu0
      %v947 = vadd.f32 %v591, %v946
      %v948 = vpop.f32.mrf.mxu0
      %949 = vmatprep.mubr.f32.mxu0 0.0
      %950 = vmatmul.mubr.f32.gmra.mxu0 %v737
      %v951 = vpop.f32.mrf.mxu0
      %v952 = vadd.f32 %v596, %v951
      %v953 = vpop.f32.mrf.mxu0
      %954 = vmatprep.mubr.f32.mxu0 0.0
      %955 = vmatmul.mubr.f32.gmra.mxu0 %v740
      %v956 = vpop.f32.mrf.mxu0
      %v957 = vadd.f32 %v601, %v956
      %v958 = vpop.f32.mrf.mxu0
      %959 = vmatprep.mubr.f32.mxu0 0.0
      %960 = vmatmul.mubr.f32.gmra.mxu0 %v743
      %v961 = vpop.f32.mrf.mxu0
      %v962 = vadd.f32 %v606, %v961
      %v963 = vpop.f32.mrf.mxu0
      %964 = vmatprep.mubr.f32.mxu0 0.0
      %965 = vmatmul.mubr.f32.gmra.mxu0 %v746
      %v966 = vpop.f32.mrf.mxu0
      %v967 = vadd.f32 %v611, %v966
      %v968 = vpop.f32.mrf.mxu0
      %969 = vmatprep.mubr.f32.mxu0 0.0
      %970 = vmatmul.mubr.f32.gmra.mxu0 %v749
      %v971 = vpop.f32.mrf.mxu0
      %v972 = vadd.f32 %v616, %v971
      %v973 = vpop.f32.mrf.mxu0
      %974 = vmatprep.mubr.f32.mxu0 0.0
      %975 = vmatmul.mubr.f32.gmra.mxu0 %v752
      %v976 = vpop.f32.mrf.mxu0
      %v977 = vadd.f32 %v621, %v976
      %v978 = vpop.f32.mrf.mxu0
      %979 = vmatprep.mubr.f32.mxu0 0.0
      %980 = vmatmul.mubr.f32.gmra.mxu0 %v755
      %v981 = vpop.f32.mrf.mxu0
      %v982 = vadd.f32 %v626, %v981
      %v983 = vpop.f32.mrf.mxu0
      %984 = vmatprep.mubr.f32.mxu0 0.0
      %985 = vmatmul.mubr.f32.gmra.mxu0 %v758
      %v986 = vpop.f32.mrf.mxu0
      %v987 = vadd.f32 %v631, %v986
      %v988 = vpop.f32.mrf.mxu0
      %989 = vmatprep.mubr.f32.mxu0 0.0
      %990 = vmatmul.mubr.f32.gmra.mxu0 %v761
      %v991 = vpop.f32.mrf.mxu0
      %v992 = vadd.f32 %v636, %v991
      %v993 = vpop.f32.mrf.mxu0
      %994 = vmatprep.mubr.f32.mxu0 0.0
      %995 = vmatmul.mubr.f32.gmra.mxu0 %v764
      %v996 = vpop.f32.mrf.mxu0
      %v997 = vadd.f32 %v641, %v996
      %v998 = vpop.f32.mrf.mxu0
      %999 = vmatprep.mubr.f32.mxu0 0.0
      %1000 = vmatmul.mubr.f32.gmra.mxu0 %v767
      %v1001 = vpop.f32.mrf.mxu0
      %v1002 = vadd.f32 %v646, %v1001
      %v1003 = vpop.f32.mrf.mxu0
      %1004 = vmatprep.mubr.f32.mxu0 0.0
      %1005 = vmatmul.mubr.f32.gmra.mxu0 %v770
      %v1006 = vpop.f32.mrf.mxu0
      %v1007 = vadd.f32 %v651, %v1006
      %v1008 = vpop.f32.mrf.mxu0
      %1009 = vmatprep.mubr.f32.mxu0 0.0
      %1010 = vmatmul.mubr.f32.gmra.mxu0 %v773
      %v1011 = vpop.f32.mrf.mxu0
      %v1012 = vadd.f32 %v656, %v1011
      %v1013 = vpop.f32.mrf.mxu0
      %1014 = vmatprep.mubr.f32.mxu0 0.0
      %1015 = vmatmul.mubr.f32.gmra.mxu0 %v776
      %v1016 = vpop.f32.mrf.mxu0
      %v1017 = vadd.f32 %v661, %v1016
      %v1018 = vpop.f32.mrf.mxu0
      %1019 = vmatprep.mubr.f32.mxu0 0.0
      %1020 = vmatmul.mubr.f32.gmra.mxu0 %v779
      %v1021 = vpop.f32.mrf.mxu0
      %v1022 = vadd.f32 %v666, %v1021
      %v1023 = vpop.f32.mrf.mxu0
      %1024 = vmatprep.mubr.f32.mxu0 0.0
      %1025 = vmatmul.mubr.f32.gmra.mxu0 %v782
      %v1026 = vpop.f32.mrf.mxu0
      %v1027 = vadd.f32 %v671, %v1026
      %v1028 = vpop.f32.mrf.mxu0
      %1029 = vmatprep.mubr.f32.mxu0 0.0
      %1030 = vmatmul.mubr.f32.gmra.mxu0 %v785
      %v1031 = vpop.f32.mrf.mxu0
      %v1032 = vadd.f32 %v676, %v1031
      %v1033 = vpop.f32.mrf.mxu0
      %1034 = vdwg.mxu0
      %s1035 = sadd.s32 %s240, 36
      %s1036 = scalar_lea.vmem %s219, %s1035
      %v1037 = vld [vmem:[%s1036] sm:$0xff]
      %v1038 = vld [vmem:[%s1036 + $0x8] sm:$0xff]
      %v1039 = vld [vmem:[%s1036 + $0x10] sm:$0xff]
      %v1040 = vld [vmem:[%s1036 + $0x18] sm:$0xff]
      %v1041 = vld [vmem:[%s1036 + $0x20] sm:$0xff]
      %v1042 = vld [vmem:[%s1036 + $0x28] sm:$0xff]
      %v1043 = vld [vmem:[%s1036 + $0x30] sm:$0xff]
      %v1044 = vld [vmem:[%s1036 + $0x38] sm:$0xff]
      %v1045 = vld [vmem:[%s1036 + $0x40] sm:$0xff]
      %v1046 = vld [vmem:[%s1036 + $0x48] sm:$0xff]
      %v1047 = vld [vmem:[%s1036 + $0x50] sm:$0xff]
      %v1048 = vld [vmem:[%s1036 + $0x58] sm:$0xff]
      %v1049 = vld [vmem:[%s1036 + $0x60] sm:$0xff]
      %v1050 = vld [vmem:[%s1036 + $0x68] sm:$0xff]
      %v1051 = vld [vmem:[%s1036 + $0x70] sm:$0xff]
      %v1052 = vld [vmem:[%s1036 + $0x78] sm:$0xff]
      %v1053 = vld [vmem:[%s1036 + $0x80] sm:$0xff]
      %v1054 = vld [vmem:[%s1036 + $0x88] sm:$0xff]
      %v1055 = vld [vmem:[%s1036 + $0x90] sm:$0xff]
      %v1056 = vld [vmem:[%s1036 + $0x98] sm:$0xff]
      %v1057 = vld [vmem:[%s1036 + $0xa0] sm:$0xff]
      %v1058 = vld [vmem:[%s1036 + $0xa8] sm:$0xff]
      %v1059 = vld [vmem:[%s1036 + $0xb0] sm:$0xff]
      %v1060 = vld [vmem:[%s1036 + $0xb8] sm:$0xff]
      %v1061 = vld [vmem:[%s1036 + $0xc0] sm:$0xff]
      %v1062 = vld [vmem:[%s1036 + $0xc8] sm:$0xff]
      %v1063 = vld [vmem:[%s1036 + $0xd0] sm:$0xff]
      %v1064 = vld [vmem:[%s1036 + $0xd8] sm:$0xff]
      %v1065 = vld [vmem:[%s1036 + $0xe0] sm:$0xff]
      %v1066 = vld [vmem:[%s1036 + $0xe8] sm:$0xff]
      %v1067 = vld [vmem:[%s1036 + $0xf0] sm:$0xff]
      %v1068 = vld [vmem:[%s1036 + $0xf8] sm:$0xff]
      %v1069 = vld [vmem:[%s1036 + $0x100] sm:$0xff]
      %v1070 = vld [vmem:[%s1036 + $0x108] sm:$0xff]
      %v1071 = vld [vmem:[%s1036 + $0x110] sm:$0xff]
      %v1072 = vld [vmem:[%s1036 + $0x118] sm:$0xff]
      %s1073 = scalar_lea.vmem %s223, 32
      %v1074 = vld [vmem:[%s1073] sm:$0xff]
      %v1075 = vld [vmem:[%s1073 + $0x8] sm:$0xf]
      %v1077 = vsel %vm321, %v1037, 0
      %v1080 = vsel %vm321, %v1038, 0
      %v1083 = vsel %vm321, %v1039, 0
      %v1086 = vsel %vm321, %v1040, 0
      %v1089 = vsel %vm321, %v1041, 0
      %v1092 = vsel %vm321, %v1042, 0
      %v1095 = vsel %vm321, %v1043, 0
      %v1098 = vsel %vm321, %v1044, 0
      %v1101 = vsel %vm321, %v1045, 0
      %v1104 = vsel %vm321, %v1046, 0
      %v1107 = vsel %vm321, %v1047, 0
      %v1110 = vsel %vm321, %v1048, 0
      %v1113 = vsel %vm321, %v1049, 0
      %v1116 = vsel %vm321, %v1050, 0
      %v1119 = vsel %vm321, %v1051, 0
      %v1122 = vsel %vm321, %v1052, 0
      %v1125 = vsel %vm321, %v1053, 0
      %v1128 = vsel %vm321, %v1054, 0
      %v1131 = vsel %vm321, %v1055, 0
      %v1134 = vsel %vm321, %v1056, 0
      %v1137 = vsel %vm321, %v1057, 0
      %v1140 = vsel %vm321, %v1058, 0
      %v1143 = vsel %vm321, %v1059, 0
      %v1146 = vsel %vm321, %v1060, 0
      %v1149 = vsel %vm321, %v1061, 0
      %v1152 = vsel %vm321, %v1062, 0
      %v1155 = vsel %vm321, %v1063, 0
      %v1158 = vsel %vm321, %v1064, 0
      %v1161 = vsel %vm321, %v1065, 0
      %v1164 = vsel %vm321, %v1066, 0
      %v1167 = vsel %vm321, %v1067, 0
      %v1170 = vsel %vm321, %v1068, 0
      %v1173 = vsel %vm321, %v1069, 0
      %v1176 = vsel %vm321, %v1070, 0
      %v1179 = vsel %vm321, %v1071, 0
      %v1182 = vsel %vm321, %v1072, 0
      %v1185 = vsel %vm430, %v1075, 0
      %1187 = vmatprep.subr.mxu0 0.0
      %1188 = vmatpush1.msra.mxu0 0.0
      %1189 = vmatprep.subr.mxu0 0.0
      %1190 = vmatpush1.msra.mxu0 0.0
      %1191 = vmatprep.subr.mxu0 0.0
      %1192 = vmatpush1.msra.mxu0 0.0
      %1193 = vmatprep.subr.mxu0 0.0
      %1194 = vmatpush1.msra.mxu0 0.0
      %1195 = vmatprep.subr.mxu0 0.0
      %1196 = vmatpush1.msra.mxu0 0.0
      %1197 = vmatprep.subr.mxu0 0.0
      %1198 = vmatpush1.msra.mxu0 0.0
      %1199 = vmatprep.subr.mxu0 0.0
      %1200 = vmatpush1.msra.mxu0 0.0
      %1201 = vmatprep.subr.mxu0 0.0
      %1202 = vmatpush1.msra.mxu0 0.0
      %1203 = vmatprep.subr.mxu0 0.0
      %1204 = vmatpush1.msra.mxu0 0.0
      %1205 = vmatprep.subr.mxu0 0.0
      %1206 = vmatpush1.msra.mxu0 0.0
      %1207 = vmatprep.subr.mxu0 0.0
      %1208 = vmatpush1.msra.mxu0 0.0
      %1209 = vmatprep.subr.mxu0 0.0
      %1210 = vmatpush1.msra.mxu0 0.0
      %1211 = vmatprep.subr.mxu0 0.0
      %1212 = vmatpush1.msra.mxu0 0.0
      %1213 = vmatprep.subr.mxu0 0.0
      %1214 = vmatpush1.msra.mxu0 0.0
      %1215 = vmatprep.subr.mxu0 0.0
      %1216 = vmatpush1.msra.mxu0 %v1185
      %1217 = vmatprep.subr.mxu0 0.0
      %1218 = vmatpush1.msra.mxu0 %v1074
      %1219 = vmatprep.subr.mxu0 0.0
      %1220 = vmatpush2.msra.mxu0 0.0
      %1221 = vmatprep.subr.mxu0 0.0
      %1222 = vmatpush2.msra.mxu0 0.0
      %1223 = vmatprep.subr.mxu0 0.0
      %1224 = vmatpush2.msra.mxu0 0.0
      %1225 = vmatprep.subr.mxu0 0.0
      %1226 = vmatpush2.msra.mxu0 0.0
      %1227 = vmatprep.subr.mxu0 0.0
      %1228 = vmatpush2.msra.mxu0 0.0
      %1229 = vmatprep.subr.mxu0 0.0
      %1230 = vmatpush2.msra.mxu0 0.0
      %1231 = vmatprep.subr.mxu0 0.0
      %1232 = vmatpush2.msra.mxu0 0.0
      %1233 = vmatprep.subr.mxu0 0.0
      %1234 = vmatpush2.msra.mxu0 0.0
      %1235 = vmatprep.subr.mxu0 0.0
      %1236 = vmatpush2.msra.mxu0 0.0
      %1237 = vmatprep.subr.mxu0 0.0
      %1238 = vmatpush2.msra.mxu0 0.0
      %1239 = vmatprep.subr.mxu0 0.0
      %1240 = vmatpush2.msra.mxu0 0.0
      %1241 = vmatprep.subr.mxu0 0.0
      %1242 = vmatpush2.msra.mxu0 0.0
      %1243 = vmatprep.subr.mxu0 0.0
      %1244 = vmatpush2.msra.mxu0 0.0
      %1245 = vmatprep.subr.mxu0 0.0
      %1246 = vmatpush2.msra.mxu0 0.0
      %1247 = vmatprep.subr.mxu0 0.0
      %1248 = vmatpush2.msra.mxu0 0.0
      %1249 = vmatprep.subr.mxu0 0.0
      %1250 = vmatpush2.msra.mxu0 0.0
      %1251 = vmatprep.mubr.f32.mxu0 0.0
      %1252 = vmatmul.mubr.f32.gmra.mxu0 %v1077
      %v1253 = vpop.f32.mrf.mxu0
      %v1254 = vadd.f32 0.0, %v1253
      %v1255 = vpop.f32.mrf.mxu0
      %1256 = vmatprep.mubr.f32.mxu0 0.0
      %1257 = vmatmul.mubr.f32.gmra.mxu0 %v1080
      %v1258 = vpop.f32.mrf.mxu0
      %v1259 = vadd.f32 0.0, %v1258
      %v1260 = vpop.f32.mrf.mxu0
      %1261 = vmatprep.mubr.f32.mxu0 0.0
      %1262 = vmatmul.mubr.f32.gmra.mxu0 %v1083
      %v1263 = vpop.f32.mrf.mxu0
      %v1264 = vadd.f32 0.0, %v1263
      %v1265 = vpop.f32.mrf.mxu0
      %1266 = vmatprep.mubr.f32.mxu0 0.0
      %1267 = vmatmul.mubr.f32.gmra.mxu0 %v1086
      %v1268 = vpop.f32.mrf.mxu0
      %v1269 = vadd.f32 0.0, %v1268
      %v1270 = vpop.f32.mrf.mxu0
      %1271 = vmatprep.mubr.f32.mxu0 0.0
      %1272 = vmatmul.mubr.f32.gmra.mxu0 %v1089
      %v1273 = vpop.f32.mrf.mxu0
      %v1274 = vadd.f32 0.0, %v1273
      %v1275 = vpop.f32.mrf.mxu0
      %1276 = vmatprep.mubr.f32.mxu0 0.0
      %1277 = vmatmul.mubr.f32.gmra.mxu0 %v1092
      %v1278 = vpop.f32.mrf.mxu0
      %v1279 = vadd.f32 0.0, %v1278
      %v1280 = vpop.f32.mrf.mxu0
      %1281 = vmatprep.mubr.f32.mxu0 0.0
      %1282 = vmatmul.mubr.f32.gmra.mxu0 %v1095
      %v1283 = vpop.f32.mrf.mxu0
      %v1284 = vadd.f32 0.0, %v1283
      %v1285 = vpop.f32.mrf.mxu0
      %1286 = vmatprep.mubr.f32.mxu0 0.0
      %1287 = vmatmul.mubr.f32.gmra.mxu0 %v1098
      %v1288 = vpop.f32.mrf.mxu0
      %v1289 = vadd.f32 0.0, %v1288
      %v1290 = vpop.f32.mrf.mxu0
      %1291 = vmatprep.mubr.f32.mxu0 0.0
      %1292 = vmatmul.mubr.f32.gmra.mxu0 %v1101
      %v1293 = vpop.f32.mrf.mxu0
      %v1294 = vadd.f32 0.0, %v1293
      %v1295 = vpop.f32.mrf.mxu0
      %1296 = vmatprep.mubr.f32.mxu0 0.0
      %1297 = vmatmul.mubr.f32.gmra.mxu0 %v1104
      %v1298 = vpop.f32.mrf.mxu0
      %v1299 = vadd.f32 0.0, %v1298
      %v1300 = vpop.f32.mrf.mxu0
      %1301 = vmatprep.mubr.f32.mxu0 0.0
      %1302 = vmatmul.mubr.f32.gmra.mxu0 %v1107
      %v1303 = vpop.f32.mrf.mxu0
      %v1304 = vadd.f32 0.0, %v1303
      %v1305 = vpop.f32.mrf.mxu0
      %1306 = vmatprep.mubr.f32.mxu0 0.0
      %1307 = vmatmul.mubr.f32.gmra.mxu0 %v1110
      %v1308 = vpop.f32.mrf.mxu0
      %v1309 = vadd.f32 0.0, %v1308
      %v1310 = vpop.f32.mrf.mxu0
      %1311 = vmatprep.mubr.f32.mxu0 0.0
      %1312 = vmatmul.mubr.f32.gmra.mxu0 %v1113
      %v1313 = vpop.f32.mrf.mxu0
      %v1314 = vadd.f32 0.0, %v1313
      %v1315 = vpop.f32.mrf.mxu0
      %1316 = vmatprep.mubr.f32.mxu0 0.0
      %1317 = vmatmul.mubr.f32.gmra.mxu0 %v1116
      %v1318 = vpop.f32.mrf.mxu0
      %v1319 = vadd.f32 0.0, %v1318
      %v1320 = vpop.f32.mrf.mxu0
      %1321 = vmatprep.mubr.f32.mxu0 0.0
      %1322 = vmatmul.mubr.f32.gmra.mxu0 %v1119
      %v1323 = vpop.f32.mrf.mxu0
      %v1324 = vadd.f32 0.0, %v1323
      %v1325 = vpop.f32.mrf.mxu0
      %1326 = vmatprep.mubr.f32.mxu0 0.0
      %1327 = vmatmul.mubr.f32.gmra.mxu0 %v1122
      %v1328 = vpop.f32.mrf.mxu0
      %v1329 = vadd.f32 0.0, %v1328
      %v1330 = vpop.f32.mrf.mxu0
      %1331 = vmatprep.mubr.f32.mxu0 0.0
      %1332 = vmatmul.mubr.f32.gmra.mxu0 %v1125
      %v1333 = vpop.f32.mrf.mxu0
      %v1334 = vadd.f32 0.0, %v1333
      %v1335 = vpop.f32.mrf.mxu0
      %1336 = vmatprep.mubr.f32.mxu0 0.0
      %1337 = vmatmul.mubr.f32.gmra.mxu0 %v1128
      %v1338 = vpop.f32.mrf.mxu0
      %v1339 = vadd.f32 0.0, %v1338
      %v1340 = vpop.f32.mrf.mxu0
      %1341 = vmatprep.mubr.f32.mxu0 0.0
      %1342 = vmatmul.mubr.f32.gmra.mxu0 %v1131
      %v1343 = vpop.f32.mrf.mxu0
      %v1344 = vadd.f32 0.0, %v1343
      %v1345 = vpop.f32.mrf.mxu0
      %1346 = vmatprep.mubr.f32.mxu0 0.0
      %1347 = vmatmul.mubr.f32.gmra.mxu0 %v1134
      %v1348 = vpop.f32.mrf.mxu0
      %v1349 = vadd.f32 0.0, %v1348
      %v1350 = vpop.f32.mrf.mxu0
      %1351 = vmatprep.mubr.f32.mxu0 0.0
      %1352 = vmatmul.mubr.f32.gmra.mxu0 %v1137
      %v1353 = vpop.f32.mrf.mxu0
      %v1354 = vadd.f32 0.0, %v1353
      %v1355 = vpop.f32.mrf.mxu0
      %1356 = vmatprep.mubr.f32.mxu0 0.0
      %1357 = vmatmul.mubr.f32.gmra.mxu0 %v1140
      %v1358 = vpop.f32.mrf.mxu0
      %v1359 = vadd.f32 0.0, %v1358
      %v1360 = vpop.f32.mrf.mxu0
      %1361 = vmatprep.mubr.f32.mxu0 0.0
      %1362 = vmatmul.mubr.f32.gmra.mxu0 %v1143
      %v1363 = vpop.f32.mrf.mxu0
      %v1364 = vadd.f32 0.0, %v1363
      %v1365 = vpop.f32.mrf.mxu0
      %1366 = vmatprep.mubr.f32.mxu0 0.0
      %1367 = vmatmul.mubr.f32.gmra.mxu0 %v1146
      %v1368 = vpop.f32.mrf.mxu0
      %v1369 = vadd.f32 0.0, %v1368
      %v1370 = vpop.f32.mrf.mxu0
      %1371 = vmatprep.mubr.f32.mxu0 0.0
      %1372 = vmatmul.mubr.f32.gmra.mxu0 %v1149
      %v1373 = vpop.f32.mrf.mxu0
      %v1374 = vadd.f32 0.0, %v1373
      %v1375 = vpop.f32.mrf.mxu0
      %1376 = vmatprep.mubr.f32.mxu0 0.0
      %1377 = vmatmul.mubr.f32.gmra.mxu0 %v1152
      %v1378 = vpop.f32.mrf.mxu0
      %v1379 = vadd.f32 0.0, %v1378
      %v1380 = vpop.f32.mrf.mxu0
      %1381 = vmatprep.mubr.f32.mxu0 0.0
      %1382 = vmatmul.mubr.f32.gmra.mxu0 %v1155
      %v1383 = vpop.f32.mrf.mxu0
      %v1384 = vadd.f32 0.0, %v1383
      %v1385 = vpop.f32.mrf.mxu0
      %1386 = vmatprep.mubr.f32.mxu0 0.0
      %1387 = vmatmul.mubr.f32.gmra.mxu0 %v1158
      %v1388 = vpop.f32.mrf.mxu0
      %v1389 = vadd.f32 0.0, %v1388
      %v1390 = vpop.f32.mrf.mxu0
      %1391 = vmatprep.mubr.f32.mxu0 0.0
      %1392 = vmatmul.mubr.f32.gmra.mxu0 %v1161
      %v1393 = vpop.f32.mrf.mxu0
      %v1394 = vadd.f32 0.0, %v1393
      %v1395 = vpop.f32.mrf.mxu0
      %1396 = vmatprep.mubr.f32.mxu0 0.0
      %1397 = vmatmul.mubr.f32.gmra.mxu0 %v1164
      %v1398 = vpop.f32.mrf.mxu0
      %v1399 = vadd.f32 0.0, %v1398
      %v1400 = vpop.f32.mrf.mxu0
      %1401 = vmatprep.mubr.f32.mxu0 0.0
      %1402 = vmatmul.mubr.f32.gmra.mxu0 %v1167
      %v1403 = vpop.f32.mrf.mxu0
      %v1404 = vadd.f32 0.0, %v1403
      %v1405 = vpop.f32.mrf.mxu0
      %1406 = vmatprep.mubr.f32.mxu0 0.0
      %1407 = vmatmul.mubr.f32.gmra.mxu0 %v1170
      %v1408 = vpop.f32.mrf.mxu0
      %v1409 = vadd.f32 0.0, %v1408
      %v1410 = vpop.f32.mrf.mxu0
      %1411 = vmatprep.mubr.f32.mxu0 0.0
      %1412 = vmatmul.mubr.f32.gmra.mxu0 %v1173
      %v1413 = vpop.f32.mrf.mxu0
      %v1414 = vadd.f32 0.0, %v1413
      %v1415 = vpop.f32.mrf.mxu0
      %1416 = vmatprep.mubr.f32.mxu0 0.0
      %1417 = vmatmul.mubr.f32.gmra.mxu0 %v1176
      %v1418 = vpop.f32.mrf.mxu0
      %v1419 = vadd.f32 0.0, %v1418
      %v1420 = vpop.f32.mrf.mxu0
      %1421 = vmatprep.mubr.f32.mxu0 0.0
      %1422 = vmatmul.mubr.f32.gmra.mxu0 %v1179
      %v1423 = vpop.f32.mrf.mxu0
      %v1424 = vadd.f32 0.0, %v1423
      %v1425 = vpop.f32.mrf.mxu0
      %1426 = vmatprep.mubr.f32.mxu0 0.0
      %1427 = vmatmul.mubr.f32.gmra.mxu0 %v1182
      %v1428 = vpop.f32.mrf.mxu0
      %v1429 = vadd.f32 0.0, %v1428
      %v1430 = vpop.f32.mrf.mxu0
      %1431 = vdwg.mxu0
      %v1432 = vadd.f32 %v857, %v1254
      %v1433 = vadd.f32 %v862, %v1259
      %v1434 = vadd.f32 %v867, %v1264
      %v1435 = vadd.f32 %v872, %v1269
      %v1436 = vadd.f32 %v877, %v1274
      %v1437 = vadd.f32 %v882, %v1279
      %v1438 = vadd.f32 %v887, %v1284
      %v1439 = vadd.f32 %v892, %v1289
      %v1440 = vadd.f32 %v897, %v1294
      %v1441 = vadd.f32 %v902, %v1299
      %v1442 = vadd.f32 %v907, %v1304
      %v1443 = vadd.f32 %v912, %v1309
      %v1444 = vadd.f32 %v917, %v1314
      %v1445 = vadd.f32 %v922, %v1319
      %v1446 = vadd.f32 %v927, %v1324
      %v1447 = vadd.f32 %v932, %v1329
      %v1448 = vadd.f32 %v937, %v1334
      %v1449 = vadd.f32 %v942, %v1339
      %v1450 = vadd.f32 %v947, %v1344
      %v1451 = vadd.f32 %v952, %v1349
      %v1452 = vadd.f32 %v957, %v1354
      %v1453 = vadd.f32 %v962, %v1359
      %v1454 = vadd.f32 %v967, %v1364
      %v1455 = vadd.f32 %v972, %v1369
      %v1456 = vadd.f32 %v977, %v1374
      %v1457 = vadd.f32 %v982, %v1379
      %v1458 = vadd.f32 %v987, %v1384
      %v1459 = vadd.f32 %v992, %v1389
      %v1460 = vadd.f32 %v997, %v1394
      %v1461 = vadd.f32 %v1002, %v1399
      %v1462 = vadd.f32 %v1007, %v1404
      %v1463 = vadd.f32 %v1012, %v1409
      %v1464 = vadd.f32 %v1017, %v1414
      %v1465 = vadd.f32 %v1022, %v1419
      %v1466 = vadd.f32 %v1027, %v1424
      %v1467 = vadd.f32 %v1032, %v1429
      %v1468 = vld [vmem:[%s226] sm:$0x1]
      %v1470 = vlaneseq
      %v1471 = vshrl.u32 %v1470, 7
      %v1472 = vsub.s32 0, %v1471
      %v1473 = vrot.slane %v1468, %v1472
      %v1475 = vadd.f32 %v1432, %v1473
      %v1476 = vadd.f32 %v1433, %v1473
      %v1477 = vadd.f32 %v1434, %v1473
      %v1478 = vadd.f32 %v1435, %v1473
      %v1479 = vadd.f32 %v1436, %v1473
      %v1480 = vadd.f32 %v1437, %v1473
      %v1481 = vadd.f32 %v1438, %v1473
      %v1482 = vadd.f32 %v1439, %v1473
      %v1483 = vadd.f32 %v1440, %v1473
      %v1484 = vadd.f32 %v1441, %v1473
      %v1485 = vadd.f32 %v1442, %v1473
      %v1486 = vadd.f32 %v1443, %v1473
      %v1487 = vadd.f32 %v1444, %v1473
      %v1488 = vadd.f32 %v1445, %v1473
      %v1489 = vadd.f32 %v1446, %v1473
      %v1490 = vadd.f32 %v1447, %v1473
      %v1491 = vadd.f32 %v1448, %v1473
      %v1492 = vadd.f32 %v1449, %v1473
      %v1493 = vadd.f32 %v1450, %v1473
      %v1494 = vadd.f32 %v1451, %v1473
      %v1495 = vadd.f32 %v1452, %v1473
      %v1496 = vadd.f32 %v1453, %v1473
      %v1497 = vadd.f32 %v1454, %v1473
      %v1498 = vadd.f32 %v1455, %v1473
      %v1499 = vadd.f32 %v1456, %v1473
      %v1500 = vadd.f32 %v1457, %v1473
      %v1501 = vadd.f32 %v1458, %v1473
      %v1502 = vadd.f32 %v1459, %v1473
      %v1503 = vadd.f32 %v1460, %v1473
      %v1504 = vadd.f32 %v1461, %v1473
      %v1505 = vadd.f32 %v1462, %v1473
      %v1506 = vadd.f32 %v1463, %v1473
      %v1507 = vadd.f32 %v1464, %v1473
      %v1508 = vadd.f32 %v1465, %v1473
      %v1509 = vadd.f32 %v1466, %v1473
      %v1510 = vadd.f32 %v1467, %v1473
      %v1511 = vmax.f32 %v1475, 0.0
      %v1512 = vmax.f32 %v1476, 0.0
      %v1513 = vmax.f32 %v1477, 0.0
      %v1514 = vmax.f32 %v1478, 0.0
      %v1515 = vmax.f32 %v1479, 0.0
      %v1516 = vmax.f32 %v1480, 0.0
      %v1517 = vmax.f32 %v1481, 0.0
      %v1518 = vmax.f32 %v1482, 0.0
      %v1519 = vmax.f32 %v1483, 0.0
      %v1520 = vmax.f32 %v1484, 0.0
      %v1521 = vmax.f32 %v1485, 0.0
      %v1522 = vmax.f32 %v1486, 0.0
      %v1523 = vmax.f32 %v1487, 0.0
      %v1524 = vmax.f32 %v1488, 0.0
      %v1525 = vmax.f32 %v1489, 0.0
      %v1526 = vmax.f32 %v1490, 0.0
      %v1527 = vmax.f32 %v1491, 0.0
      %v1528 = vmax.f32 %v1492, 0.0
      %v1529 = vmax.f32 %v1493, 0.0
      %v1530 = vmax.f32 %v1494, 0.0
      %v1531 = vmax.f32 %v1495, 0.0
      %v1532 = vmax.f32 %v1496, 0.0
      %v1533 = vmax.f32 %v1497, 0.0
      %v1534 = vmax.f32 %v1498, 0.0
      %v1535 = vmax.f32 %v1499, 0.0
      %v1536 = vmax.f32 %v1500, 0.0
      %v1537 = vmax.f32 %v1501, 0.0
      %v1538 = vmax.f32 %v1502, 0.0
      %v1539 = vmax.f32 %v1503, 0.0
      %v1540 = vmax.f32 %v1504, 0.0
      %v1541 = vmax.f32 %v1505, 0.0
      %v1542 = vmax.f32 %v1506, 0.0
      %v1543 = vmax.f32 %v1507, 0.0
      %v1544 = vmax.f32 %v1508, 0.0
      %v1545 = vmax.f32 %v1509, 0.0
      %v1546 = vmax.f32 %v1510, 0.0
      %vm1547 = vcmask 64512
      %1548 = vst.msk [vmem:[%s238] sm:$0xff] %vm1547, %v1511
      %1549 = vst.msk [vmem:[%s238 + $0x8] sm:$0xff] %vm1547, %v1512
      %1550 = vst.msk [vmem:[%s238 + $0x10] sm:$0xff] %vm1547, %v1513
      %1551 = vst.msk [vmem:[%s238 + $0x18] sm:$0xff] %vm1547, %v1514
      %1552 = vst.msk [vmem:[%s238 + $0x20] sm:$0xff] %vm1547, %v1515
      %1553 = vst.msk [vmem:[%s238 + $0x28] sm:$0xff] %vm1547, %v1516
      %1554 = vst.msk [vmem:[%s238 + $0x30] sm:$0xff] %vm1547, %v1517
      %1555 = vst.msk [vmem:[%s238 + $0x38] sm:$0xff] %vm1547, %v1518
      %1556 = vst.msk [vmem:[%s238 + $0x40] sm:$0xff] %vm1547, %v1519
      %1557 = vst.msk [vmem:[%s238 + $0x48] sm:$0xff] %vm1547, %v1520
      %1558 = vst.msk [vmem:[%s238 + $0x50] sm:$0xff] %vm1547, %v1521
      %1559 = vst.msk [vmem:[%s238 + $0x58] sm:$0xff] %vm1547, %v1522
      %1560 = vst.msk [vmem:[%s238 + $0x60] sm:$0xff] %vm1547, %v1523
      %1561 = vst.msk [vmem:[%s238 + $0x68] sm:$0xff] %vm1547, %v1524
      %1562 = vst.msk [vmem:[%s238 + $0x70] sm:$0xff] %vm1547, %v1525
      %1563 = vst.msk [vmem:[%s238 + $0x78] sm:$0xff] %vm1547, %v1526
      %1564 = vst.msk [vmem:[%s238 + $0x80] sm:$0xff] %vm1547, %v1527
      %1565 = vst.msk [vmem:[%s238 + $0x88] sm:$0xff] %vm1547, %v1528
      %1566 = vst.msk [vmem:[%s238 + $0x90] sm:$0xff] %vm1547, %v1529
      %1567 = vst.msk [vmem:[%s238 + $0x98] sm:$0xff] %vm1547, %v1530
      %1568 = vst.msk [vmem:[%s238 + $0xa0] sm:$0xff] %vm1547, %v1531
      %1569 = vst.msk [vmem:[%s238 + $0xa8] sm:$0xff] %vm1547, %v1532
      %1570 = vst.msk [vmem:[%s238 + $0xb0] sm:$0xff] %vm1547, %v1533
      %1571 = vst.msk [vmem:[%s238 + $0xb8] sm:$0xff] %vm1547, %v1534
      %1572 = vst.msk [vmem:[%s238 + $0xc0] sm:$0xff] %vm1547, %v1535
      %1573 = vst.msk [vmem:[%s238 + $0xc8] sm:$0xff] %vm1547, %v1536
      %1574 = vst.msk [vmem:[%s238 + $0xd0] sm:$0xff] %vm1547, %v1537
      %1575 = vst.msk [vmem:[%s238 + $0xd8] sm:$0xff] %vm1547, %v1538
      %1576 = vst.msk [vmem:[%s238 + $0xe0] sm:$0xff] %vm1547, %v1539
      %1577 = vst.msk [vmem:[%s238 + $0xe8] sm:$0xff] %vm1547, %v1540
      %1578 = vst.msk [vmem:[%s238 + $0xf0] sm:$0xff] %vm1547, %v1541
      %1579 = vst.msk [vmem:[%s238 + $0xf8] sm:$0xff] %vm1547, %v1542
      %1580 = vst.msk [vmem:[%s238 + $0x100] sm:$0xff] %vm1547, %v1543
      %1581 = vst.msk [vmem:[%s238 + $0x108] sm:$0xff] %vm1547, %v1544
      %1582 = vst.msk [vmem:[%s238 + $0x110] sm:$0xff] %vm1547, %v1545
      %1583 = vst.msk [vmem:[%s238 + $0x118] sm:$0xff] %vm1547, %v1546
      %s1584 = smul.u32 36, %s21
      %p1585 = scmp.lt.s32.totalorder %s19, 1
      %s1586 = scalar_select %p1585, %s19, 1
      %p1587 = scmp.lt.s32.totalorder %s1584, 35
      %s1588 = scalar_select %p1587, %s1584, 35
      %p1589 = scmp.lt.s32.totalorder %s20, 0
      %s1590 = scalar_select %p1589, %s20, 0
      %s1591 = sadd.s32 %s1590, %s1588
      %s1592 = smul.addr %s1586, 36
      %s1593 = sadd.s32 %s1591, %s1592
      %s1594 = smul.addr %s1593, 8
      %s1595 = scalar_lea.vmem %s3, %s1594
      // Predicated region
      $region33: #{tpu_custom_call.1} parent=31 // pred_check
        %p1596 = pneg %p133
      $region34: #{tpu_custom_call.1} parent=31 // pred_check_branch
        %1598 = sbr.rel (%p1596) target = $region36
      $region35: #{tpu_custom_call.1} parent=31 // pred_region
        %s1599 = smul.u32 36, %s21
      $region36: #{tpu_custom_call.1} parent=31 // pred_fallthru
        _
    $region32: #{tpu_custom_call.1} parent=5 // pred_fallthru
      _
    %p1600 = scmp.le.s32.totalorder 2, %s9
    // Predicated region
    $region37: #{tpu_custom_call.1} parent=5 // pred_check
      %p1601 = pneg %p1600
    $region38: #{tpu_custom_call.1} parent=5 // pred_check_branch
      %1603 = sbr.rel (%p1601) target = $region40
    $region39: #{tpu_custom_call.1} parent=5 // pred_region
      %s1604 = ssub.s32 %s9, 2
      // Predicated region
      $region41: #{tpu_custom_call.1} parent=39 // pred_check
        %p1605 = pneg %p139
      $region42: #{tpu_custom_call.1} parent=39 // pred_check_branch
        %1607 = sbr.rel (%p1605) target = $region44
      $region43: #{tpu_custom_call.1} parent=39 // pred_region
        %s1608 = smul.u32 36, %s24
        %p1609 = scmp.lt.s32.totalorder %s22, 1
        %s1610 = scalar_select %p1609, %s22, 1
        %p1611 = scmp.lt.s32.totalorder %s1608, 35
        %s1612 = scalar_select %p1611, %s1608, 35
        %p1613 = scmp.lt.s32.totalorder %s23, 0
        %s1614 = scalar_select %p1613, %s23, 0
        %s1615 = sadd.s32 %s1614, %s1612
        %s1616 = smul.addr %s1610, 36
        %s1617 = sadd.s32 %s1615, %s1616
        %s1618 = smul.addr %s1617, 8
        %s1619 = scalar_lea.vmem %s3, %s1618
      $region44: #{tpu_custom_call.1} parent=39 // pred_fallthru
        _
    $region40: #{tpu_custom_call.1} parent=5 // pred_fallthru
      _
  $region6: #{tpu_custom_call.1} parent=0 // loop_footer
    %s13 = sadd.s32 1, %s9
  $region7: #{tpu_custom_call.1} parent=0 // loop_footer_branch
    %8 = sbr.rel target = $region3
  $region8: #{tpu_custom_call.1} parent=0 // loop_exit
    _

</llo_original>
